<compile_context>
chip_gen: v7x
topology: tpu7x:2x2x1
jax: 0.10.0
libtpu: 0.0.40
codegen_flags: <defaults>
</compile_context>

<pallas_src>
import jax
import jax.numpy as jnp
from jax import lax
from jax.experimental import pallas as pl
from jax.experimental.pallas import tpu as pltpu


def _round_up(x, m):
    return (x + m - 1) // m * m


def _lstm_bidir_kernel(emb_ref, lens_ref, wih_ref, b_ref,
                       whh_f_ref, whh_b_ref, c0_f_ref, c0_b_ref,
                       out_ref, gx_ref):
    S, tN, E = emb_ref.shape
    H = c0_f_ref.shape[1]
    G = 4 * H

    # ---- hoisted input projection: one big bf16 MXU matmul for BOTH directions ----
    x2d = emb_ref[...].reshape(S * tN, E)                       # bf16 (S*tN, E)
    gx_ref[...] = (jnp.dot(x2d, wih_ref[...],
                           preferred_element_type=jnp.float32)
                   + b_ref[...])                                # f32 (S*tN, 8H)

    whh_f = whh_f_ref[...]                                      # bf16 (H, 4H)
    whh_b = whh_b_ref[...]
    lens = lens_ref[...]                                        # int32 (tN, 1)

    def activate(gates, c):
        # gate order [i, f, o | g]: one contiguous sigmoid slice + one tanh slice
        sig = jax.nn.sigmoid(gates[:, :3 * H])
        i_g = sig[:, 0 * H:1 * H]
        f_g = sig[:, 1 * H:2 * H]
        o_g = sig[:, 2 * H:3 * H]
        g_g = jnp.tanh(gates[:, 3 * H:])
        c_new = f_g * c + i_g * g_g
        h_new = o_g * jnp.tanh(c_new)
        return h_new, c_new

    # ---- fused fwd/bwd recurrence: two independent h @ Whh chains per step ----
    # NOTE: for large tile_n*H move acc_f/acc_b into VMEM scratch to bound vreg
    # pressure; at these tile sizes the six carries fit comfortably in vregs.
    def body(t, carry):
        h_f, c_f, acc_f, h_b, c_b, acc_b = carry
        tb = S - 1 - t
        gx_f = gx_ref[pl.ds(pl.multiple_of(t * tN, 8), tN), pl.ds(0, G)]
        gx_b = gx_ref[pl.ds(pl.multiple_of(tb * tN, 8), tN), pl.ds(G, G)]
        gates_f = gx_f + jnp.dot(h_f.astype(jnp.bfloat16), whh_f,
                                 preferred_element_type=jnp.float32)
        gates_b = gx_b + jnp.dot(h_b.astype(jnp.bfloat16), whh_b,
                                 preferred_element_type=jnp.float32)
        h_f, c_f = activate(gates_f, c_f)
        h_b, c_b = activate(gates_b, c_b)
        m_f = (t < lens).astype(jnp.float32)                    # (tN, 1)
        m_b = (tb < lens).astype(jnp.float32)
        acc_f = acc_f + m_f * h_f
        acc_b = acc_b + m_b * h_b
        return h_f, c_f, acc_f, h_b, c_b, acc_b

    zeros = jnp.zeros((tN, H), jnp.float32)
    carry = (zeros, c0_f_ref[...], zeros, zeros, c0_b_ref[...], zeros)
    _, _, acc_f, _, _, acc_b = lax.fori_loop(0, S, body, carry, unroll=True)

    inv_len = pl.reciprocal(jnp.maximum(lens, 1).astype(jnp.float32),
                            approx=True)                        # (tN, 1)
    out_ref[:, 0:H] = acc_f * inv_len
    out_ref[:, H:2 * H] = acc_b * inv_len


def _reorder_gates(w, H):
    # PyTorch gate order [i, f, g, o]  ->  kernel gate order [i, f, o, g]
    return jnp.concatenate([w[..., :2 * H], w[..., 3 * H:4 * H],
                            w[..., 2 * H:3 * H]], axis=-1)


def lstm_forward(x_index, masks, params, c0, *, tile_n=256):
    """Pallas implementation of LSTM.forward. Returns (B, Q, 2*hd_size)."""
    B, Q, S = x_index.shape
    H = params["hd_size"]
    E = params["embeddings"].shape[1]
    N = B * Q

    idx = x_index.reshape(N, S)
    # masks are padding (prefix) masks, as fed to the PyTorch module: per-row lengths
    # carry the same information as the full (S, N, 1) mask stream.
    lens = jnp.sum(masks.reshape(N, S).astype(jnp.int32), axis=1,
                   keepdims=True)                               # (N, 1) int32

    # time-major gather: transpose the small index array, not the big emb array.
    # TODO(synk): the embedding gather itself stays as plain-JAX glue; an in-kernel
    # DMA gather from the HBM table (PrefetchScalarGridSpec) would avoid
    # materializing the dense (S, N, E) sequence.
    emb_t = jnp.take(params["embeddings"], idx.T, axis=0).astype(jnp.bfloat16)

    # concat fwd/bwd weights for the single fused input projection; bf16 operands.
    wih = jnp.concatenate([_reorder_gates(params["wih_f"], H),
                           _reorder_gates(params["wih_b"], H)],
                          axis=1).astype(jnp.bfloat16)          # (E, 8H)
    b_cat = jnp.concatenate([_reorder_gates(params["b_f"], H),
                             _reorder_gates(params["b_b"], H)],
                            axis=1).astype(jnp.float32)         # (1, 8H)
    whh_f = _reorder_gates(params["whh_f"], H).astype(jnp.bfloat16)
    whh_b = _reorder_gates(params["whh_b"], H).astype(jnp.bfloat16)
    c0_f = c0[0].astype(jnp.float32)
    c0_b = c0[1].astype(jnp.float32)

    # batch tiling (multiples of 8 sublanes), grid over batch tiles.
    N_pad = _round_up(N, 8)
    tn = min(_round_up(tile_n, 8), N_pad)
    N_pad = _round_up(N_pad, tn)

    def pad_n(a, axis):
        pad = N_pad - a.shape[axis]
        if pad == 0:
            return a
        cfg = [(0, 0)] * a.ndim
        cfg[axis] = (0, pad)
        return jnp.pad(a, cfg)

    emb_t = pad_n(emb_t, 1)
    lens_p = pad_n(lens, 0)
    c0_f = pad_n(c0_f, 0)
    c0_b = pad_n(c0_b, 0)

    grid = (N_pad // tn,)
    out = pl.pallas_call(
        _lstm_bidir_kernel,
        out_shape=jax.ShapeDtypeStruct((N_pad, 2 * H), jnp.float32),
        grid=grid,
        in_specs=[
            pl.BlockSpec((S, tn, E), lambda i: (0, i, 0)),       # embedded seq
            pl.BlockSpec((tn, 1), lambda i: (i, 0)),             # per-row lengths
            pl.BlockSpec((E, 8 * H), lambda i: (0, 0)),          # Wih (resident)
            pl.BlockSpec((1, 8 * H), lambda i: (0, 0)),          # bias (resident)
            pl.BlockSpec((H, 4 * H), lambda i: (0, 0)),          # Whh fwd (resident)
            pl.BlockSpec((H, 4 * H), lambda i: (0, 0)),          # Whh bwd (resident)
            pl.BlockSpec((tn, H), lambda i: (i, 0)),             # c0 fwd
            pl.BlockSpec((tn, H), lambda i: (i, 0)),             # c0 bwd
        ],
        out_specs=pl.BlockSpec((tn, 2 * H), lambda i: (i, 0)),
        scratch_shapes=[pltpu.VMEM((S * tn, 8 * H), jnp.float32)],
        compiler_params=pltpu.CompilerParams(
            dimension_semantics=("parallel",),
            vmem_limit_bytes=32 * 1024 * 1024),
    )(emb_t, lens_p, wih, b_cat, whh_f, whh_b, c0_f, c0_b)

    return out[:N].reshape(B, Q, 2 * H)


def lstm_forward_ref(x_index, masks, params, c0):
    """Pure-JAX f32 reference (PyTorch gate order [i,f,g,o]) for correctness."""
    B, Q, S = x_index.shape
    H = params["hd_size"]
    N = B * Q
    idx = x_index.reshape(N, S)
    m = masks.reshape(N, S).astype(jnp.float32)
    emb = jnp.take(params["embeddings"], idx, axis=0)            # (N, S, E)

    def cell(x_t, h, c, wih, whh, b):
        gates = x_t @ wih + h @ whh + b
        i_g = jax.nn.sigmoid(gates[:, 0 * H:1 * H])
        f_g = jax.nn.sigmoid(gates[:, 1 * H:2 * H])
        g_g = jnp.tanh(gates[:, 2 * H:3 * H])
        o_g = jax.nn.sigmoid(gates[:, 3 * H:4 * H])
        c_new = f_g * c + i_g * g_g
        return o_g * jnp.tanh(c_new), c_new

    def run(direction_emb, wih, whh, b, c_init):
        def scan_fn(carry, x_t):
            h, c = carry
            h, c = cell(x_t, h, c, wih, whh, b)
            return (h, c), h
        _, hs = lax.scan(scan_fn, (jnp.zeros((N, H), jnp.float32), c_init),
                         jnp.transpose(direction_emb, (1, 0, 2)))
        return jnp.transpose(hs, (1, 0, 2))                      # (N, S, H)

    h_f = run(emb, params["wih_f"], params["whh_f"], params["b_f"], c0[0])
    h_b = run(emb[:, ::-1, :], params["wih_b"], params["whh_b"],
              params["b_b"], c0[1])[:, ::-1, :]
    output = jnp.concatenate([h_f, h_b], axis=2)                 # (N, S, 2H)

    masked = m[:, :, None] * output
    summed = jnp.sum(masked, axis=1)
    true_len = jnp.sum(m, axis=1, keepdims=True)
    return (summed / true_len).reshape(B, Q, 2 * H)


def init_params(key, vocab_size, embed_dim, hd_size):
    ks = jax.random.split(key, 9)
    k = 1.0 / jnp.sqrt(hd_size)
    embeddings = jax.random.normal(ks[0], (vocab_size, embed_dim), jnp.float32)
    # padding_idx=0 row set to zero (matches nn.Embedding(padding_idx=0))
    embeddings = embeddings.at[0].set(0.0)

    def u(kk, shape):
        return jax.random.uniform(kk, shape, jnp.float32, -k, k)

    params = dict(
        embeddings=embeddings,
        hd_size=hd_size,
        # PyTorch gate order [i, f, g, o]; W already transposed: x @ W -> gates
        wih_f=u(ks[1], (embed_dim, 4 * hd_size)),
        whh_f=u(ks[2], (hd_size, 4 * hd_size)),
        b_f=u(ks[3], (1, 4 * hd_size)) + u(ks[4], (1, 4 * hd_size)),  # b_ih + b_hh
        wih_b=u(ks[5], (embed_dim, 4 * hd_size)),
        whh_b=u(ks[6], (hd_size, 4 * hd_size)),
        b_b=u(ks[7], (1, 4 * hd_size)) + u(ks[8], (1, 4 * hd_size)),
    )
    return params


if __name__ == "__main__":
    key = jax.random.PRNGKey(0)
    k_par, k_idx, k_c0, k_len = jax.random.split(key, 4)

    B, Q, S = 2, 4, 8          # x_index: (batch, num_questions, seq_len)
    vocab_size, embed_dim, hd_size = 50, 16, 32

    params = init_params(k_par, vocab_size, embed_dim, hd_size)

    x_index = jax.random.randint(k_idx, (B, Q, S), 1, vocab_size, jnp.int32)
    # variable true lengths in [3, S], mask = 1 for t < len (padding masks)
    lens = jax.random.randint(k_len, (B, Q), 3, S + 1)
    masks = (jnp.arange(S)[None, None, :] < lens[:, :, None]).astype(jnp.int32)
    x_index = x_index * masks  # padded positions -> index 0 (padding_idx)

    # torch.randn c0 of shape (2, N, H) -> deterministic here (h0 is zeros)
    c0 = jax.random.normal(k_c0, (2, B * Q, hd_size), jnp.float32)

    out = lstm_forward(x_index, masks, params, c0)
    out = jax.block_until_ready(out)

    ref = jax.block_until_ready(lstm_forward_ref(x_index, masks, params, c0))
    assert out.shape == (B, Q, 2 * hd_size)
    # tolerance accounts for bf16 matmul operands + approx reciprocal in the kernel
    assert jnp.allclose(out, ref, rtol=3e-2, atol=3e-2), "mismatch vs reference"

    print("KERNEL_OK")
</pallas_src>

<mosaic_0001>
module attributes {stable_mosaic.version = 11 : i64} {
  func.func @_lstm_bidir_kernel(%arg0: i32, %arg1: memref<8x8x16xbf16, #tpu.memory_space<vmem>>, %arg2: memref<8x1xi32, #tpu.memory_space<vmem>>, %arg3: memref<16x256xbf16, #tpu.memory_space<vmem>>, %arg4: memref<1x256xf32, #tpu.memory_space<vmem>>, %arg5: memref<32x128xbf16, #tpu.memory_space<vmem>>, %arg6: memref<32x128xbf16, #tpu.memory_space<vmem>>, %arg7: memref<8x32xf32, #tpu.memory_space<vmem>>, %arg8: memref<8x32xf32, #tpu.memory_space<vmem>>, %arg9: memref<8x64xf32, #tpu.memory_space<vmem>>, %arg10: memref<64x256xf32, #tpu.memory_space<vmem>>) attributes {dimension_semantics = [#tpu.dimension_semantics<parallel>], iteration_bounds = array<i64: 1>, scalar_prefetch = 0 : i64, scratch_operands = 1 : i64, tpu.core_type = #tpu.core_type<tc>, window_params = [{transform_indices = @transform_0, window_bounds = array<i64: 8, 8, 16>}, {transform_indices = @transform_1, window_bounds = array<i64: 8, 1>}, {pipeline_mode = #tpu.pipeline_mode<synchronous>, transform_indices = @transform_2, window_bounds = array<i64: 16, 256>}, {pipeline_mode = #tpu.pipeline_mode<synchronous>, transform_indices = @transform_3, window_bounds = array<i64: 1, 256>}, {pipeline_mode = #tpu.pipeline_mode<synchronous>, transform_indices = @transform_4, window_bounds = array<i64: 32, 128>}, {pipeline_mode = #tpu.pipeline_mode<synchronous>, transform_indices = @transform_5, window_bounds = array<i64: 32, 128>}, {transform_indices = @transform_6, window_bounds = array<i64: 8, 32>}, {transform_indices = @transform_7, window_bounds = array<i64: 8, 32>}, {transform_indices = @transform_8, window_bounds = array<i64: 8, 64>}]} {
    %c0 = arith.constant 0 : index
    %c0_0 = arith.constant 0 : index
    %c0_1 = arith.constant 0 : index
    %0 = vector.load %arg1[%c0, %c0_0, %c0_1] : memref<8x8x16xbf16, #tpu.memory_space<vmem>>, vector<8x8x16xbf16>
    %1 = vector.shape_cast %0 : vector<8x8x16xbf16> to vector<64x16xbf16>
    %c0_2 = arith.constant 0 : index
    %c0_3 = arith.constant 0 : index
    %2 = vector.load %arg3[%c0_2, %c0_3] : memref<16x256xbf16, #tpu.memory_space<vmem>>, vector<16x256xbf16>
    %cst = arith.constant dense<0.000000e+00> : vector<64x256xf32>
    %3 = tpu.matmul %1, %2, %cst {dimension_numbers = #tpu.dot_dimension_numbers<[1], [0], [0], [1], [0, 0, 1, 1], [], []>} : vector<64x16xbf16>, vector<16x256xbf16>, vector<64x256xf32> -> vector<64x256xf32>
    %c0_4 = arith.constant 0 : index
    %c0_5 = arith.constant 0 : index
    %4 = vector.load %arg4[%c0_4, %c0_5] : memref<1x256xf32, #tpu.memory_space<vmem>>, vector<1x256xf32>
    %5 = vector.broadcast %4 : vector<1x256xf32> to vector<64x256xf32>
    %6 = arith.addf %3, %5 : vector<64x256xf32>
    %c0_6 = arith.constant 0 : index
    %c0_7 = arith.constant 0 : index
    %7 = vector.load %arg10[%c0_6, %c0_7] : memref<64x256xf32, #tpu.memory_space<vmem>>, vector<64x256xf32>
    tpu.vector_store %arg10[%c0_6, %c0_7], %6 {strides = array<i32>} : memref<64x256xf32, #tpu.memory_space<vmem>>, vector<64x256xf32>,
    %c0_8 = arith.constant 0 : index
    %c0_9 = arith.constant 0 : index
    %8 = vector.load %arg5[%c0_8, %c0_9] : memref<32x128xbf16, #tpu.memory_space<vmem>>, vector<32x128xbf16>
    %c0_10 = arith.constant 0 : index
    %c0_11 = arith.constant 0 : index
    %9 = vector.load %arg6[%c0_10, %c0_11] : memref<32x128xbf16, #tpu.memory_space<vmem>>, vector<32x128xbf16>
    %c0_12 = arith.constant 0 : index
    %c0_13 = arith.constant 0 : index
    %10 = vector.load %arg2[%c0_12, %c0_13] : memref<8x1xi32, #tpu.memory_space<vmem>>, vector<8x1xi32>
    %cst_14 = arith.constant 0.000000e+00 : f32
    %11 = vector.broadcast %cst_14 : f32 to vector<8x32xf32>
    %c0_15 = arith.constant 0 : index
    %c0_16 = arith.constant 0 : index
    %12 = vector.load %arg7[%c0_15, %c0_16] : memref<8x32xf32, #tpu.memory_space<vmem>>, vector<8x32xf32>
    %c0_17 = arith.constant 0 : index
    %c0_18 = arith.constant 0 : index
    %13 = vector.load %arg8[%c0_17, %c0_18] : memref<8x32xf32, #tpu.memory_space<vmem>>, vector<8x32xf32>
    %c0_i32 = arith.constant 0 : i32
    %c7_i32 = arith.constant 7 : i32
    %14 = arith.subi %c7_i32, %c0_i32 : i32
    %c8_i32 = arith.constant 8 : i32
    %15 = arith.muli %c0_i32, %c8_i32 : i32
    %16 = tpu.assume_multiple %15, 8 : i32
    %17 = arith.index_cast %16 : i32 to index
    %c0_19 = arith.constant 0 : index
    %18 = vector.load %arg10[%17, %c0_19] : memref<64x256xf32, #tpu.memory_space<vmem>>, vector<8x128xf32>
    %c8_i32_20 = arith.constant 8 : i32
    %19 = arith.muli %14, %c8_i32_20 : i32
    %20 = tpu.assume_multiple %19, 8 : i32
    %21 = arith.index_cast %20 : i32 to index
    %c128 = arith.constant 128 : index
    %22 = vector.load %arg10[%21, %c128] : memref<64x256xf32, #tpu.memory_space<vmem>>, vector<8x128xf32>
    %23 = arith.truncf %11 : vector<8x32xf32> to vector<8x32xbf16>
    %cst_21 = arith.constant dense<0.000000e+00> : vector<8x128xf32>
    %24 = tpu.matmul %23, %8, %cst_21 {dimension_numbers = #tpu.dot_dimension_numbers<[1], [0], [0], [1], [0, 0, 1, 1], [], []>} : vector<8x32xbf16>, vector<32x128xbf16>, vector<8x128xf32> -> vector<8x128xf32>
    %25 = arith.addf %18, %24 : vector<8x128xf32>
    %26 = arith.truncf %11 : vector<8x32xf32> to vector<8x32xbf16>
    %cst_22 = arith.constant dense<0.000000e+00> : vector<8x128xf32>
    %27 = tpu.matmul %26, %9, %cst_22 {dimension_numbers = #tpu.dot_dimension_numbers<[1], [0], [0], [1], [0, 0, 1, 1], [], []>} : vector<8x32xbf16>, vector<32x128xbf16>, vector<8x128xf32> -> vector<8x128xf32>
    %28 = arith.addf %22, %27 : vector<8x128xf32>
    %29 = vector.extract_strided_slice %25 {offsets = [0, 0], sizes = [8, 96], strides = [1, 1]} : vector<8x128xf32> to vector<8x96xf32>
    %30 = arith.negf %29 : vector<8x96xf32>
    %31 = math.exp %30 : vector<8x96xf32>
    %cst_23 = arith.constant 1.000000e+00 : f32
    %32 = vector.broadcast %cst_23 : f32 to vector<8x96xf32>
    %33 = arith.addf %32, %31 : vector<8x96xf32>
    %34 = arith.divf %32, %33 : vector<8x96xf32>
    %35 = vector.extract_strided_slice %34 {offsets = [0, 0], sizes = [8, 32], strides = [1, 1]} : vector<8x96xf32> to vector<8x32xf32>
    %36 = vector.extract_strided_slice %34 {offsets = [0, 32], sizes = [8, 32], strides = [1, 1]} : vector<8x96xf32> to vector<8x32xf32>
    %37 = vector.extract_strided_slice %34 {offsets = [0, 64], sizes = [8, 32], strides = [1, 1]} : vector<8x96xf32> to vector<8x32xf32>
    %38 = vector.extract_strided_slice %25 {offsets = [0, 96], sizes = [8, 32], strides = [1, 1]} : vector<8x128xf32> to vector<8x32xf32>
    %39 = math.tanh %38 : vector<8x32xf32>
    %40 = arith.mulf %36, %12 : vector<8x32xf32>
    %41 = arith.mulf %35, %39 : vector<8x32xf32>
    %42 = arith.addf %40, %41 : vector<8x32xf32>
    %43 = math.tanh %42 : vector<8x32xf32>
    %44 = arith.mulf %37, %43 : vector<8x32xf32>
    %45 = vector.extract_strided_slice %28 {offsets = [0, 0], sizes = [8, 96], strides = [1, 1]} : vector<8x128xf32> to vector<8x96xf32>
    %46 = arith.negf %45 : vector<8x96xf32>
    %47 = math.exp %46 : vector<8x96xf32>
    %cst_24 = arith.constant 1.000000e+00 : f32
    %48 = vector.broadcast %cst_24 : f32 to vector<8x96xf32>
    %49 = arith.addf %48, %47 : vector<8x96xf32>
    %50 = arith.divf %48, %49 : vector<8x96xf32>
    %51 = vector.extract_strided_slice %50 {offsets = [0, 0], sizes = [8, 32], strides = [1, 1]} : vector<8x96xf32> to vector<8x32xf32>
    %52 = vector.extract_strided_slice %50 {offsets = [0, 32], sizes = [8, 32], strides = [1, 1]} : vector<8x96xf32> to vector<8x32xf32>
    %53 = vector.extract_strided_slice %50 {offsets = [0, 64], sizes = [8, 32], strides = [1, 1]} : vector<8x96xf32> to vector<8x32xf32>
    %54 = vector.extract_strided_slice %28 {offsets = [0, 96], sizes = [8, 32], strides = [1, 1]} : vector<8x128xf32> to vector<8x32xf32>
    %55 = math.tanh %54 : vector<8x32xf32>
    %56 = arith.mulf %52, %13 : vector<8x32xf32>
    %57 = arith.mulf %51, %55 : vector<8x32xf32>
    %58 = arith.addf %56, %57 : vector<8x32xf32>
    %59 = math.tanh %58 : vector<8x32xf32>
    %60 = arith.mulf %53, %59 : vector<8x32xf32>
    %61 = vector.broadcast %c0_i32 : i32 to vector<8x1xi32>
    %62 = arith.cmpi slt, %61, %10 : vector<8x1xi32>
    %63 = arith.extui %62 : vector<8x1xi1> to vector<8x1xi32>
    %64 = arith.sitofp %63 : vector<8x1xi32> to vector<8x1xf32>
    %65 = vector.broadcast %14 : i32 to vector<8x1xi32>
    %66 = arith.cmpi slt, %65, %10 : vector<8x1xi32>
    %67 = arith.extui %66 : vector<8x1xi1> to vector<8x1xi32>
    %68 = arith.sitofp %67 : vector<8x1xi32> to vector<8x1xf32>
    %69 = vector.broadcast %64 : vector<8x1xf32> to vector<8x32xf32>
    %70 = arith.mulf %69, %44 : vector<8x32xf32>
    %71 = arith.addf %11, %70 : vector<8x32xf32>
    %72 = vector.broadcast %68 : vector<8x1xf32> to vector<8x32xf32>
    %73 = arith.mulf %72, %60 : vector<8x32xf32>
    %74 = arith.addf %11, %73 : vector<8x32xf32>
    %c1_i32 = arith.constant 1 : i32
    %c7_i32_25 = arith.constant 7 : i32
    %75 = arith.subi %c7_i32_25, %c1_i32 : i32
    %c8_i32_26 = arith.constant 8 : i32
    %76 = arith.muli %c1_i32, %c8_i32_26 : i32
    %77 = tpu.assume_multiple %76, 8 : i32
    %78 = arith.index_cast %77 : i32 to index
    %c0_27 = arith.constant 0 : index
    %79 = vector.load %arg10[%78, %c0_27] : memref<64x256xf32, #tpu.memory_space<vmem>>, vector<8x128xf32>
    %c8_i32_28 = arith.constant 8 : i32
    %80 = arith.muli %75, %c8_i32_28 : i32
    %81 = tpu.assume_multiple %80, 8 : i32
    %82 = arith.index_cast %81 : i32 to index
    %c128_29 = arith.constant 128 : index
    %83 = vector.load %arg10[%82, %c128_29] : memref<64x256xf32, #tpu.memory_space<vmem>>, vector<8x128xf32>
    %84 = arith.truncf %44 : vector<8x32xf32> to vector<8x32xbf16>
    %cst_30 = arith.constant dense<0.000000e+00> : vector<8x128xf32>
    %85 = tpu.matmul %84, %8, %cst_30 {dimension_numbers = #tpu.dot_dimension_numbers<[1], [0], [0], [1], [0, 0, 1, 1], [], []>} : vector<8x32xbf16>, vector<32x128xbf16>, vector<8x128xf32> -> vector<8x128xf32>
    %86 = arith.addf %79, %85 : vector<8x128xf32>
    %87 = arith.truncf %60 : vector<8x32xf32> to vector<8x32xbf16>
    %cst_31 = arith.constant dense<0.000000e+00> : vector<8x128xf32>
    %88 = tpu.matmul %87, %9, %cst_31 {dimension_numbers = #tpu.dot_dimension_numbers<[1], [0], [0], [1], [0, 0, 1, 1], [], []>} : vector<8x32xbf16>, vector<32x128xbf16>, vector<8x128xf32> -> vector<8x128xf32>
    %89 = arith.addf %83, %88 : vector<8x128xf32>
    %90 = vector.extract_strided_slice %86 {offsets = [0, 0], sizes = [8, 96], strides = [1, 1]} : vector<8x128xf32> to vector<8x96xf32>
    %91 = arith.negf %90 : vector<8x96xf32>
    %92 = math.exp %91 : vector<8x96xf32>
    %cst_32 = arith.constant 1.000000e+00 : f32
    %93 = vector.broadcast %cst_32 : f32 to vector<8x96xf32>
    %94 = arith.addf %93, %92 : vector<8x96xf32>
    %95 = arith.divf %93, %94 : vector<8x96xf32>
    %96 = vector.extract_strided_slice %95 {offsets = [0, 0], sizes = [8, 32], strides = [1, 1]} : vector<8x96xf32> to vector<8x32xf32>
    %97 = vector.extract_strided_slice %95 {offsets = [0, 32], sizes = [8, 32], strides = [1, 1]} : vector<8x96xf32> to vector<8x32xf32>
    %98 = vector.extract_strided_slice %95 {offsets = [0, 64], sizes = [8, 32], strides = [1, 1]} : vector<8x96xf32> to vector<8x32xf32>
    %99 = vector.extract_strided_slice %86 {offsets = [0, 96], sizes = [8, 32], strides = [1, 1]} : vector<8x128xf32> to vector<8x32xf32>
    %100 = math.tanh %99 : vector<8x32xf32>
    %101 = arith.mulf %97, %42 : vector<8x32xf32>
    %102 = arith.mulf %96, %100 : vector<8x32xf32>
    %103 = arith.addf %101, %102 : vector<8x32xf32>
    %104 = math.tanh %103 : vector<8x32xf32>
    %105 = arith.mulf %98, %104 : vector<8x32xf32>
    %106 = vector.extract_strided_slice %89 {offsets = [0, 0], sizes = [8, 96], strides = [1, 1]} : vector<8x128xf32> to vector<8x96xf32>
    %107 = arith.negf %106 : vector<8x96xf32>
    %108 = math.exp %107 : vector<8x96xf32>
    %cst_33 = arith.constant 1.000000e+00 : f32
    %109 = vector.broadcast %cst_33 : f32 to vector<8x96xf32>
    %110 = arith.addf %109, %108 : vector<8x96xf32>
    %111 = arith.divf %109, %110 : vector<8x96xf32>
    %112 = vector.extract_strided_slice %111 {offsets = [0, 0], sizes = [8, 32], strides = [1, 1]} : vector<8x96xf32> to vector<8x32xf32>
    %113 = vector.extract_strided_slice %111 {offsets = [0, 32], sizes = [8, 32], strides = [1, 1]} : vector<8x96xf32> to vector<8x32xf32>
    %114 = vector.extract_strided_slice %111 {offsets = [0, 64], sizes = [8, 32], strides = [1, 1]} : vector<8x96xf32> to vector<8x32xf32>
    %115 = vector.extract_strided_slice %89 {offsets = [0, 96], sizes = [8, 32], strides = [1, 1]} : vector<8x128xf32> to vector<8x32xf32>
    %116 = math.tanh %115 : vector<8x32xf32>
    %117 = arith.mulf %113, %58 : vector<8x32xf32>
    %118 = arith.mulf %112, %116 : vector<8x32xf32>
    %119 = arith.addf %117, %118 : vector<8x32xf32>
    %120 = math.tanh %119 : vector<8x32xf32>
    %121 = arith.mulf %114, %120 : vector<8x32xf32>
    %122 = vector.broadcast %c1_i32 : i32 to vector<8x1xi32>
    %123 = arith.cmpi slt, %122, %10 : vector<8x1xi32>
    %124 = arith.extui %123 : vector<8x1xi1> to vector<8x1xi32>
    %125 = arith.sitofp %124 : vector<8x1xi32> to vector<8x1xf32>
    %126 = vector.broadcast %75 : i32 to vector<8x1xi32>
    %127 = arith.cmpi slt, %126, %10 : vector<8x1xi32>
    %128 = arith.extui %127 : vector<8x1xi1> to vector<8x1xi32>
    %129 = arith.sitofp %128 : vector<8x1xi32> to vector<8x1xf32>
    %130 = vector.broadcast %125 : vector<8x1xf32> to vector<8x32xf32>
    %131 = arith.mulf %130, %105 : vector<8x32xf32>
    %132 = arith.addf %71, %131 : vector<8x32xf32>
    %133 = vector.broadcast %129 : vector<8x1xf32> to vector<8x32xf32>
    %134 = arith.mulf %133, %121 : vector<8x32xf32>
    %135 = arith.addf %74, %134 : vector<8x32xf32>
    %c2_i32 = arith.constant 2 : i32
    %c7_i32_34 = arith.constant 7 : i32
    %136 = arith.subi %c7_i32_34, %c2_i32 : i32
    %c8_i32_35 = arith.constant 8 : i32
    %137 = arith.muli %c2_i32, %c8_i32_35 : i32
    %138 = tpu.assume_multiple %137, 8 : i32
    %139 = arith.index_cast %138 : i32 to index
    %c0_36 = arith.constant 0 : index
    %140 = vector.load %arg10[%139, %c0_36] : memref<64x256xf32, #tpu.memory_space<vmem>>, vector<8x128xf32>
    %c8_i32_37 = arith.constant 8 : i32
    %141 = arith.muli %136, %c8_i32_37 : i32
    %142 = tpu.assume_multiple %141, 8 : i32
    %143 = arith.index_cast %142 : i32 to index
    %c128_38 = arith.constant 128 : index
    %144 = vector.load %arg10[%143, %c128_38] : memref<64x256xf32, #tpu.memory_space<vmem>>, vector<8x128xf32>
    %145 = arith.truncf %105 : vector<8x32xf32> to vector<8x32xbf16>
    %cst_39 = arith.constant dense<0.000000e+00> : vector<8x128xf32>
    %146 = tpu.matmul %145, %8, %cst_39 {dimension_numbers = #tpu.dot_dimension_numbers<[1], [0], [0], [1], [0, 0, 1, 1], [], []>} : vector<8x32xbf16>, vector<32x128xbf16>, vector<8x128xf32> -> vector<8x128xf32>
    %147 = arith.addf %140, %146 : vector<8x128xf32>
    %148 = arith.truncf %121 : vector<8x32xf32> to vector<8x32xbf16>
    %cst_40 = arith.constant dense<0.000000e+00> : vector<8x128xf32>
    %149 = tpu.matmul %148, %9, %cst_40 {dimension_numbers = #tpu.dot_dimension_numbers<[1], [0], [0], [1], [0, 0, 1, 1], [], []>} : vector<8x32xbf16>, vector<32x128xbf16>, vector<8x128xf32> -> vector<8x128xf32>
    %150 = arith.addf %144, %149 : vector<8x128xf32>
    %151 = vector.extract_strided_slice %147 {offsets = [0, 0], sizes = [8, 96], strides = [1, 1]} : vector<8x128xf32> to vector<8x96xf32>
    %152 = arith.negf %151 : vector<8x96xf32>
    %153 = math.exp %152 : vector<8x96xf32>
    %cst_41 = arith.constant 1.000000e+00 : f32
    %154 = vector.broadcast %cst_41 : f32 to vector<8x96xf32>
    %155 = arith.addf %154, %153 : vector<8x96xf32>
    %156 = arith.divf %154, %155 : vector<8x96xf32>
    %157 = vector.extract_strided_slice %156 {offsets = [0, 0], sizes = [8, 32], strides = [1, 1]} : vector<8x96xf32> to vector<8x32xf32>
    %158 = vector.extract_strided_slice %156 {offsets = [0, 32], sizes = [8, 32], strides = [1, 1]} : vector<8x96xf32> to vector<8x32xf32>
    %159 = vector.extract_strided_slice %156 {offsets = [0, 64], sizes = [8, 32], strides = [1, 1]} : vector<8x96xf32> to vector<8x32xf32>
    %160 = vector.extract_strided_slice %147 {offsets = [0, 96], sizes = [8, 32], strides = [1, 1]} : vector<8x128xf32> to vector<8x32xf32>
    %161 = math.tanh %160 : vector<8x32xf32>
    %162 = arith.mulf %158, %103 : vector<8x32xf32>
    %163 = arith.mulf %157, %161 : vector<8x32xf32>
    %164 = arith.addf %162, %163 : vector<8x32xf32>
    %165 = math.tanh %164 : vector<8x32xf32>
    %166 = arith.mulf %159, %165 : vector<8x32xf32>
    %167 = vector.extract_strided_slice %150 {offsets = [0, 0], sizes = [8, 96], strides = [1, 1]} : vector<8x128xf32> to vector<8x96xf32>
    %168 = arith.negf %167 : vector<8x96xf32>
    %169 = math.exp %168 : vector<8x96xf32>
    %cst_42 = arith.constant 1.000000e+00 : f32
    %170 = vector.broadcast %cst_42 : f32 to vector<8x96xf32>
    %171 = arith.addf %170, %169 : vector<8x96xf32>
    %172 = arith.divf %170, %171 : vector<8x96xf32>
    %173 = vector.extract_strided_slice %172 {offsets = [0, 0], sizes = [8, 32], strides = [1, 1]} : vector<8x96xf32> to vector<8x32xf32>
    %174 = vector.extract_strided_slice %172 {offsets = [0, 32], sizes = [8, 32], strides = [1, 1]} : vector<8x96xf32> to vector<8x32xf32>
    %175 = vector.extract_strided_slice %172 {offsets = [0, 64], sizes = [8, 32], strides = [1, 1]} : vector<8x96xf32> to vector<8x32xf32>
    %176 = vector.extract_strided_slice %150 {offsets = [0, 96], sizes = [8, 32], strides = [1, 1]} : vector<8x128xf32> to vector<8x32xf32>
    %177 = math.tanh %176 : vector<8x32xf32>
    %178 = arith.mulf %174, %119 : vector<8x32xf32>
    %179 = arith.mulf %173, %177 : vector<8x32xf32>
    %180 = arith.addf %178, %179 : vector<8x32xf32>
    %181 = math.tanh %180 : vector<8x32xf32>
    %182 = arith.mulf %175, %181 : vector<8x32xf32>
    %183 = vector.broadcast %c2_i32 : i32 to vector<8x1xi32>
    %184 = arith.cmpi slt, %183, %10 : vector<8x1xi32>
    %185 = arith.extui %184 : vector<8x1xi1> to vector<8x1xi32>
    %186 = arith.sitofp %185 : vector<8x1xi32> to vector<8x1xf32>
    %187 = vector.broadcast %136 : i32 to vector<8x1xi32>
    %188 = arith.cmpi slt, %187, %10 : vector<8x1xi32>
    %189 = arith.extui %188 : vector<8x1xi1> to vector<8x1xi32>
    %190 = arith.sitofp %189 : vector<8x1xi32> to vector<8x1xf32>
    %191 = vector.broadcast %186 : vector<8x1xf32> to vector<8x32xf32>
    %192 = arith.mulf %191, %166 : vector<8x32xf32>
    %193 = arith.addf %132, %192 : vector<8x32xf32>
    %194 = vector.broadcast %190 : vector<8x1xf32> to vector<8x32xf32>
    %195 = arith.mulf %194, %182 : vector<8x32xf32>
    %196 = arith.addf %135, %195 : vector<8x32xf32>
    %c3_i32 = arith.constant 3 : i32
    %c7_i32_43 = arith.constant 7 : i32
    %197 = arith.subi %c7_i32_43, %c3_i32 : i32
    %c8_i32_44 = arith.constant 8 : i32
    %198 = arith.muli %c3_i32, %c8_i32_44 : i32
    %199 = tpu.assume_multiple %198, 8 : i32
    %200 = arith.index_cast %199 : i32 to index
    %c0_45 = arith.constant 0 : index
    %201 = vector.load %arg10[%200, %c0_45] : memref<64x256xf32, #tpu.memory_space<vmem>>, vector<8x128xf32>
    %c8_i32_46 = arith.constant 8 : i32
    %202 = arith.muli %197, %c8_i32_46 : i32
    %203 = tpu.assume_multiple %202, 8 : i32
    %204 = arith.index_cast %203 : i32 to index
    %c128_47 = arith.constant 128 : index
    %205 = vector.load %arg10[%204, %c128_47] : memref<64x256xf32, #tpu.memory_space<vmem>>, vector<8x128xf32>
    %206 = arith.truncf %166 : vector<8x32xf32> to vector<8x32xbf16>
    %cst_48 = arith.constant dense<0.000000e+00> : vector<8x128xf32>
    %207 = tpu.matmul %206, %8, %cst_48 {dimension_numbers = #tpu.dot_dimension_numbers<[1], [0], [0], [1], [0, 0, 1, 1], [], []>} : vector<8x32xbf16>, vector<32x128xbf16>, vector<8x128xf32> -> vector<8x128xf32>
    %208 = arith.addf %201, %207 : vector<8x128xf32>
    %209 = arith.truncf %182 : vector<8x32xf32> to vector<8x32xbf16>
    %cst_49 = arith.constant dense<0.000000e+00> : vector<8x128xf32>
    %210 = tpu.matmul %209, %9, %cst_49 {dimension_numbers = #tpu.dot_dimension_numbers<[1], [0], [0], [1], [0, 0, 1, 1], [], []>} : vector<8x32xbf16>, vector<32x128xbf16>, vector<8x128xf32> -> vector<8x128xf32>
    %211 = arith.addf %205, %210 : vector<8x128xf32>
    %212 = vector.extract_strided_slice %208 {offsets = [0, 0], sizes = [8, 96], strides = [1, 1]} : vector<8x128xf32> to vector<8x96xf32>
    %213 = arith.negf %212 : vector<8x96xf32>
    %214 = math.exp %213 : vector<8x96xf32>
    %cst_50 = arith.constant 1.000000e+00 : f32
    %215 = vector.broadcast %cst_50 : f32 to vector<8x96xf32>
    %216 = arith.addf %215, %214 : vector<8x96xf32>
    %217 = arith.divf %215, %216 : vector<8x96xf32>
    %218 = vector.extract_strided_slice %217 {offsets = [0, 0], sizes = [8, 32], strides = [1, 1]} : vector<8x96xf32> to vector<8x32xf32>
    %219 = vector.extract_strided_slice %217 {offsets = [0, 32], sizes = [8, 32], strides = [1, 1]} : vector<8x96xf32> to vector<8x32xf32>
    %220 = vector.extract_strided_slice %217 {offsets = [0, 64], sizes = [8, 32], strides = [1, 1]} : vector<8x96xf32> to vector<8x32xf32>
    %221 = vector.extract_strided_slice %208 {offsets = [0, 96], sizes = [8, 32], strides = [1, 1]} : vector<8x128xf32> to vector<8x32xf32>
    %222 = math.tanh %221 : vector<8x32xf32>
    %223 = arith.mulf %219, %164 : vector<8x32xf32>
    %224 = arith.mulf %218, %222 : vector<8x32xf32>
    %225 = arith.addf %223, %224 : vector<8x32xf32>
    %226 = math.tanh %225 : vector<8x32xf32>
    %227 = arith.mulf %220, %226 : vector<8x32xf32>
    %228 = vector.extract_strided_slice %211 {offsets = [0, 0], sizes = [8, 96], strides = [1, 1]} : vector<8x128xf32> to vector<8x96xf32>
    %229 = arith.negf %228 : vector<8x96xf32>
    %230 = math.exp %229 : vector<8x96xf32>
    %cst_51 = arith.constant 1.000000e+00 : f32
    %231 = vector.broadcast %cst_51 : f32 to vector<8x96xf32>
    %232 = arith.addf %231, %230 : vector<8x96xf32>
    %233 = arith.divf %231, %232 : vector<8x96xf32>
    %234 = vector.extract_strided_slice %233 {offsets = [0, 0], sizes = [8, 32], strides = [1, 1]} : vector<8x96xf32> to vector<8x32xf32>
    %235 = vector.extract_strided_slice %233 {offsets = [0, 32], sizes = [8, 32], strides = [1, 1]} : vector<8x96xf32> to vector<8x32xf32>
    %236 = vector.extract_strided_slice %233 {offsets = [0, 64], sizes = [8, 32], strides = [1, 1]} : vector<8x96xf32> to vector<8x32xf32>
    %237 = vector.extract_strided_slice %211 {offsets = [0, 96], sizes = [8, 32], strides = [1, 1]} : vector<8x128xf32> to vector<8x32xf32>
    %238 = math.tanh %237 : vector<8x32xf32>
    %239 = arith.mulf %235, %180 : vector<8x32xf32>
    %240 = arith.mulf %234, %238 : vector<8x32xf32>
    %241 = arith.addf %239, %240 : vector<8x32xf32>
    %242 = math.tanh %241 : vector<8x32xf32>
    %243 = arith.mulf %236, %242 : vector<8x32xf32>
    %244 = vector.broadcast %c3_i32 : i32 to vector<8x1xi32>
    %245 = arith.cmpi slt, %244, %10 : vector<8x1xi32>
    %246 = arith.extui %245 : vector<8x1xi1> to vector<8x1xi32>
    %247 = arith.sitofp %246 : vector<8x1xi32> to vector<8x1xf32>
    %248 = vector.broadcast %197 : i32 to vector<8x1xi32>
    %249 = arith.cmpi slt, %248, %10 : vector<8x1xi32>
    %250 = arith.extui %249 : vector<8x1xi1> to vector<8x1xi32>
    %251 = arith.sitofp %250 : vector<8x1xi32> to vector<8x1xf32>
    %252 = vector.broadcast %247 : vector<8x1xf32> to vector<8x32xf32>
    %253 = arith.mulf %252, %227 : vector<8x32xf32>
    %254 = arith.addf %193, %253 : vector<8x32xf32>
    %255 = vector.broadcast %251 : vector<8x1xf32> to vector<8x32xf32>
    %256 = arith.mulf %255, %243 : vector<8x32xf32>
    %257 = arith.addf %196, %256 : vector<8x32xf32>
    %c4_i32 = arith.constant 4 : i32
    %c7_i32_52 = arith.constant 7 : i32
    %258 = arith.subi %c7_i32_52, %c4_i32 : i32
    %c8_i32_53 = arith.constant 8 : i32
    %259 = arith.muli %c4_i32, %c8_i32_53 : i32
    %260 = tpu.assume_multiple %259, 8 : i32
    %261 = arith.index_cast %260 : i32 to index
    %c0_54 = arith.constant 0 : index
    %262 = vector.load %arg10[%261, %c0_54] : memref<64x256xf32, #tpu.memory_space<vmem>>, vector<8x128xf32>
    %c8_i32_55 = arith.constant 8 : i32
    %263 = arith.muli %258, %c8_i32_55 : i32
    %264 = tpu.assume_multiple %263, 8 : i32
    %265 = arith.index_cast %264 : i32 to index
    %c128_56 = arith.constant 128 : index
    %266 = vector.load %arg10[%265, %c128_56] : memref<64x256xf32, #tpu.memory_space<vmem>>, vector<8x128xf32>
    %267 = arith.truncf %227 : vector<8x32xf32> to vector<8x32xbf16>
    %cst_57 = arith.constant dense<0.000000e+00> : vector<8x128xf32>
    %268 = tpu.matmul %267, %8, %cst_57 {dimension_numbers = #tpu.dot_dimension_numbers<[1], [0], [0], [1], [0, 0, 1, 1], [], []>} : vector<8x32xbf16>, vector<32x128xbf16>, vector<8x128xf32> -> vector<8x128xf32>
    %269 = arith.addf %262, %268 : vector<8x128xf32>
    %270 = arith.truncf %243 : vector<8x32xf32> to vector<8x32xbf16>
    %cst_58 = arith.constant dense<0.000000e+00> : vector<8x128xf32>
    %271 = tpu.matmul %270, %9, %cst_58 {dimension_numbers = #tpu.dot_dimension_numbers<[1], [0], [0], [1], [0, 0, 1, 1], [], []>} : vector<8x32xbf16>, vector<32x128xbf16>, vector<8x128xf32> -> vector<8x128xf32>
    %272 = arith.addf %266, %271 : vector<8x128xf32>
    %273 = vector.extract_strided_slice %269 {offsets = [0, 0], sizes = [8, 96], strides = [1, 1]} : vector<8x128xf32> to vector<8x96xf32>
    %274 = arith.negf %273 : vector<8x96xf32>
    %275 = math.exp %274 : vector<8x96xf32>
    %cst_59 = arith.constant 1.000000e+00 : f32
    %276 = vector.broadcast %cst_59 : f32 to vector<8x96xf32>
    %277 = arith.addf %276, %275 : vector<8x96xf32>
    %278 = arith.divf %276, %277 : vector<8x96xf32>
    %279 = vector.extract_strided_slice %278 {offsets = [0, 0], sizes = [8, 32], strides = [1, 1]} : vector<8x96xf32> to vector<8x32xf32>
    %280 = vector.extract_strided_slice %278 {offsets = [0, 32], sizes = [8, 32], strides = [1, 1]} : vector<8x96xf32> to vector<8x32xf32>
    %281 = vector.extract_strided_slice %278 {offsets = [0, 64], sizes = [8, 32], strides = [1, 1]} : vector<8x96xf32> to vector<8x32xf32>
    %282 = vector.extract_strided_slice %269 {offsets = [0, 96], sizes = [8, 32], strides = [1, 1]} : vector<8x128xf32> to vector<8x32xf32>
    %283 = math.tanh %282 : vector<8x32xf32>
    %284 = arith.mulf %280, %225 : vector<8x32xf32>
    %285 = arith.mulf %279, %283 : vector<8x32xf32>
    %286 = arith.addf %284, %285 : vector<8x32xf32>
    %287 = math.tanh %286 : vector<8x32xf32>
    %288 = arith.mulf %281, %287 : vector<8x32xf32>
    %289 = vector.extract_strided_slice %272 {offsets = [0, 0], sizes = [8, 96], strides = [1, 1]} : vector<8x128xf32> to vector<8x96xf32>
    %290 = arith.negf %289 : vector<8x96xf32>
    %291 = math.exp %290 : vector<8x96xf32>
    %cst_60 = arith.constant 1.000000e+00 : f32
    %292 = vector.broadcast %cst_60 : f32 to vector<8x96xf32>
    %293 = arith.addf %292, %291 : vector<8x96xf32>
    %294 = arith.divf %292, %293 : vector<8x96xf32>
    %295 = vector.extract_strided_slice %294 {offsets = [0, 0], sizes = [8, 32], strides = [1, 1]} : vector<8x96xf32> to vector<8x32xf32>
    %296 = vector.extract_strided_slice %294 {offsets = [0, 32], sizes = [8, 32], strides = [1, 1]} : vector<8x96xf32> to vector<8x32xf32>
    %297 = vector.extract_strided_slice %294 {offsets = [0, 64], sizes = [8, 32], strides = [1, 1]} : vector<8x96xf32> to vector<8x32xf32>
    %298 = vector.extract_strided_slice %272 {offsets = [0, 96], sizes = [8, 32], strides = [1, 1]} : vector<8x128xf32> to vector<8x32xf32>
    %299 = math.tanh %298 : vector<8x32xf32>
    %300 = arith.mulf %296, %241 : vector<8x32xf32>
    %301 = arith.mulf %295, %299 : vector<8x32xf32>
    %302 = arith.addf %300, %301 : vector<8x32xf32>
    %303 = math.tanh %302 : vector<8x32xf32>
    %304 = arith.mulf %297, %303 : vector<8x32xf32>
    %305 = vector.broadcast %c4_i32 : i32 to vector<8x1xi32>
    %306 = arith.cmpi slt, %305, %10 : vector<8x1xi32>
    %307 = arith.extui %306 : vector<8x1xi1> to vector<8x1xi32>
    %308 = arith.sitofp %307 : vector<8x1xi32> to vector<8x1xf32>
    %309 = vector.broadcast %258 : i32 to vector<8x1xi32>
    %310 = arith.cmpi slt, %309, %10 : vector<8x1xi32>
    %311 = arith.extui %310 : vector<8x1xi1> to vector<8x1xi32>
    %312 = arith.sitofp %311 : vector<8x1xi32> to vector<8x1xf32>
    %313 = vector.broadcast %308 : vector<8x1xf32> to vector<8x32xf32>
    %314 = arith.mulf %313, %288 : vector<8x32xf32>
    %315 = arith.addf %254, %314 : vector<8x32xf32>
    %316 = vector.broadcast %312 : vector<8x1xf32> to vector<8x32xf32>
    %317 = arith.mulf %316, %304 : vector<8x32xf32>
    %318 = arith.addf %257, %317 : vector<8x32xf32>
    %c5_i32 = arith.constant 5 : i32
    %c7_i32_61 = arith.constant 7 : i32
    %319 = arith.subi %c7_i32_61, %c5_i32 : i32
    %c8_i32_62 = arith.constant 8 : i32
    %320 = arith.muli %c5_i32, %c8_i32_62 : i32
    %321 = tpu.assume_multiple %320, 8 : i32
    %322 = arith.index_cast %321 : i32 to index
    %c0_63 = arith.constant 0 : index
    %323 = vector.load %arg10[%322, %c0_63] : memref<64x256xf32, #tpu.memory_space<vmem>>, vector<8x128xf32>
    %c8_i32_64 = arith.constant 8 : i32
    %324 = arith.muli %319, %c8_i32_64 : i32
    %325 = tpu.assume_multiple %324, 8 : i32
    %326 = arith.index_cast %325 : i32 to index
    %c128_65 = arith.constant 128 : index
    %327 = vector.load %arg10[%326, %c128_65] : memref<64x256xf32, #tpu.memory_space<vmem>>, vector<8x128xf32>
    %328 = arith.truncf %288 : vector<8x32xf32> to vector<8x32xbf16>
    %cst_66 = arith.constant dense<0.000000e+00> : vector<8x128xf32>
    %329 = tpu.matmul %328, %8, %cst_66 {dimension_numbers = #tpu.dot_dimension_numbers<[1], [0], [0], [1], [0, 0, 1, 1], [], []>} : vector<8x32xbf16>, vector<32x128xbf16>, vector<8x128xf32> -> vector<8x128xf32>
    %330 = arith.addf %323, %329 : vector<8x128xf32>
    %331 = arith.truncf %304 : vector<8x32xf32> to vector<8x32xbf16>
    %cst_67 = arith.constant dense<0.000000e+00> : vector<8x128xf32>
    %332 = tpu.matmul %331, %9, %cst_67 {dimension_numbers = #tpu.dot_dimension_numbers<[1], [0], [0], [1], [0, 0, 1, 1], [], []>} : vector<8x32xbf16>, vector<32x128xbf16>, vector<8x128xf32> -> vector<8x128xf32>
    %333 = arith.addf %327, %332 : vector<8x128xf32>
    %334 = vector.extract_strided_slice %330 {offsets = [0, 0], sizes = [8, 96], strides = [1, 1]} : vector<8x128xf32> to vector<8x96xf32>
    %335 = arith.negf %334 : vector<8x96xf32>
    %336 = math.exp %335 : vector<8x96xf32>
    %cst_68 = arith.constant 1.000000e+00 : f32
    %337 = vector.broadcast %cst_68 : f32 to vector<8x96xf32>
    %338 = arith.addf %337, %336 : vector<8x96xf32>
    %339 = arith.divf %337, %338 : vector<8x96xf32>
    %340 = vector.extract_strided_slice %339 {offsets = [0, 0], sizes = [8, 32], strides = [1, 1]} : vector<8x96xf32> to vector<8x32xf32>
    %341 = vector.extract_strided_slice %339 {offsets = [0, 32], sizes = [8, 32], strides = [1, 1]} : vector<8x96xf32> to vector<8x32xf32>
    %342 = vector.extract_strided_slice %339 {offsets = [0, 64], sizes = [8, 32], strides = [1, 1]} : vector<8x96xf32> to vector<8x32xf32>
    %343 = vector.extract_strided_slice %330 {offsets = [0, 96], sizes = [8, 32], strides = [1, 1]} : vector<8x128xf32> to vector<8x32xf32>
    %344 = math.tanh %343 : vector<8x32xf32>
    %345 = arith.mulf %341, %286 : vector<8x32xf32>
    %346 = arith.mulf %340, %344 : vector<8x32xf32>
    %347 = arith.addf %345, %346 : vector<8x32xf32>
    %348 = math.tanh %347 : vector<8x32xf32>
    %349 = arith.mulf %342, %348 : vector<8x32xf32>
    %350 = vector.extract_strided_slice %333 {offsets = [0, 0], sizes = [8, 96], strides = [1, 1]} : vector<8x128xf32> to vector<8x96xf32>
    %351 = arith.negf %350 : vector<8x96xf32>
    %352 = math.exp %351 : vector<8x96xf32>
    %cst_69 = arith.constant 1.000000e+00 : f32
    %353 = vector.broadcast %cst_69 : f32 to vector<8x96xf32>
    %354 = arith.addf %353, %352 : vector<8x96xf32>
    %355 = arith.divf %353, %354 : vector<8x96xf32>
    %356 = vector.extract_strided_slice %355 {offsets = [0, 0], sizes = [8, 32], strides = [1, 1]} : vector<8x96xf32> to vector<8x32xf32>
    %357 = vector.extract_strided_slice %355 {offsets = [0, 32], sizes = [8, 32], strides = [1, 1]} : vector<8x96xf32> to vector<8x32xf32>
    %358 = vector.extract_strided_slice %355 {offsets = [0, 64], sizes = [8, 32], strides = [1, 1]} : vector<8x96xf32> to vector<8x32xf32>
    %359 = vector.extract_strided_slice %333 {offsets = [0, 96], sizes = [8, 32], strides = [1, 1]} : vector<8x128xf32> to vector<8x32xf32>
    %360 = math.tanh %359 : vector<8x32xf32>
    %361 = arith.mulf %357, %302 : vector<8x32xf32>
    %362 = arith.mulf %356, %360 : vector<8x32xf32>
    %363 = arith.addf %361, %362 : vector<8x32xf32>
    %364 = math.tanh %363 : vector<8x32xf32>
    %365 = arith.mulf %358, %364 : vector<8x32xf32>
    %366 = vector.broadcast %c5_i32 : i32 to vector<8x1xi32>
    %367 = arith.cmpi slt, %366, %10 : vector<8x1xi32>
    %368 = arith.extui %367 : vector<8x1xi1> to vector<8x1xi32>
    %369 = arith.sitofp %368 : vector<8x1xi32> to vector<8x1xf32>
    %370 = vector.broadcast %319 : i32 to vector<8x1xi32>
    %371 = arith.cmpi slt, %370, %10 : vector<8x1xi32>
    %372 = arith.extui %371 : vector<8x1xi1> to vector<8x1xi32>
    %373 = arith.sitofp %372 : vector<8x1xi32> to vector<8x1xf32>
    %374 = vector.broadcast %369 : vector<8x1xf32> to vector<8x32xf32>
    %375 = arith.mulf %374, %349 : vector<8x32xf32>
    %376 = arith.addf %315, %375 : vector<8x32xf32>
    %377 = vector.broadcast %373 : vector<8x1xf32> to vector<8x32xf32>
    %378 = arith.mulf %377, %365 : vector<8x32xf32>
    %379 = arith.addf %318, %378 : vector<8x32xf32>
    %c6_i32 = arith.constant 6 : i32
    %c7_i32_70 = arith.constant 7 : i32
    %380 = arith.subi %c7_i32_70, %c6_i32 : i32
    %c8_i32_71 = arith.constant 8 : i32
    %381 = arith.muli %c6_i32, %c8_i32_71 : i32
    %382 = tpu.assume_multiple %381, 8 : i32
    %383 = arith.index_cast %382 : i32 to index
    %c0_72 = arith.constant 0 : index
    %384 = vector.load %arg10[%383, %c0_72] : memref<64x256xf32, #tpu.memory_space<vmem>>, vector<8x128xf32>
    %c8_i32_73 = arith.constant 8 : i32
    %385 = arith.muli %380, %c8_i32_73 : i32
    %386 = tpu.assume_multiple %385, 8 : i32
    %387 = arith.index_cast %386 : i32 to index
    %c128_74 = arith.constant 128 : index
    %388 = vector.load %arg10[%387, %c128_74] : memref<64x256xf32, #tpu.memory_space<vmem>>, vector<8x128xf32>
    %389 = arith.truncf %349 : vector<8x32xf32> to vector<8x32xbf16>
    %cst_75 = arith.constant dense<0.000000e+00> : vector<8x128xf32>
    %390 = tpu.matmul %389, %8, %cst_75 {dimension_numbers = #tpu.dot_dimension_numbers<[1], [0], [0], [1], [0, 0, 1, 1], [], []>} : vector<8x32xbf16>, vector<32x128xbf16>, vector<8x128xf32> -> vector<8x128xf32>
    %391 = arith.addf %384, %390 : vector<8x128xf32>
    %392 = arith.truncf %365 : vector<8x32xf32> to vector<8x32xbf16>
    %cst_76 = arith.constant dense<0.000000e+00> : vector<8x128xf32>
    %393 = tpu.matmul %392, %9, %cst_76 {dimension_numbers = #tpu.dot_dimension_numbers<[1], [0], [0], [1], [0, 0, 1, 1], [], []>} : vector<8x32xbf16>, vector<32x128xbf16>, vector<8x128xf32> -> vector<8x128xf32>
    %394 = arith.addf %388, %393 : vector<8x128xf32>
    %395 = vector.extract_strided_slice %391 {offsets = [0, 0], sizes = [8, 96], strides = [1, 1]} : vector<8x128xf32> to vector<8x96xf32>
    %396 = arith.negf %395 : vector<8x96xf32>
    %397 = math.exp %396 : vector<8x96xf32>
    %cst_77 = arith.constant 1.000000e+00 : f32
    %398 = vector.broadcast %cst_77 : f32 to vector<8x96xf32>
    %399 = arith.addf %398, %397 : vector<8x96xf32>
    %400 = arith.divf %398, %399 : vector<8x96xf32>
    %401 = vector.extract_strided_slice %400 {offsets = [0, 0], sizes = [8, 32], strides = [1, 1]} : vector<8x96xf32> to vector<8x32xf32>
    %402 = vector.extract_strided_slice %400 {offsets = [0, 32], sizes = [8, 32], strides = [1, 1]} : vector<8x96xf32> to vector<8x32xf32>
    %403 = vector.extract_strided_slice %400 {offsets = [0, 64], sizes = [8, 32], strides = [1, 1]} : vector<8x96xf32> to vector<8x32xf32>
    %404 = vector.extract_strided_slice %391 {offsets = [0, 96], sizes = [8, 32], strides = [1, 1]} : vector<8x128xf32> to vector<8x32xf32>
    %405 = math.tanh %404 : vector<8x32xf32>
    %406 = arith.mulf %402, %347 : vector<8x32xf32>
    %407 = arith.mulf %401, %405 : vector<8x32xf32>
    %408 = arith.addf %406, %407 : vector<8x32xf32>
    %409 = math.tanh %408 : vector<8x32xf32>
    %410 = arith.mulf %403, %409 : vector<8x32xf32>
    %411 = vector.extract_strided_slice %394 {offsets = [0, 0], sizes = [8, 96], strides = [1, 1]} : vector<8x128xf32> to vector<8x96xf32>
    %412 = arith.negf %411 : vector<8x96xf32>
    %413 = math.exp %412 : vector<8x96xf32>
    %cst_78 = arith.constant 1.000000e+00 : f32
    %414 = vector.broadcast %cst_78 : f32 to vector<8x96xf32>
    %415 = arith.addf %414, %413 : vector<8x96xf32>
    %416 = arith.divf %414, %415 : vector<8x96xf32>
    %417 = vector.extract_strided_slice %416 {offsets = [0, 0], sizes = [8, 32], strides = [1, 1]} : vector<8x96xf32> to vector<8x32xf32>
    %418 = vector.extract_strided_slice %416 {offsets = [0, 32], sizes = [8, 32], strides = [1, 1]} : vector<8x96xf32> to vector<8x32xf32>
    %419 = vector.extract_strided_slice %416 {offsets = [0, 64], sizes = [8, 32], strides = [1, 1]} : vector<8x96xf32> to vector<8x32xf32>
    %420 = vector.extract_strided_slice %394 {offsets = [0, 96], sizes = [8, 32], strides = [1, 1]} : vector<8x128xf32> to vector<8x32xf32>
    %421 = math.tanh %420 : vector<8x32xf32>
    %422 = arith.mulf %418, %363 : vector<8x32xf32>
    %423 = arith.mulf %417, %421 : vector<8x32xf32>
    %424 = arith.addf %422, %423 : vector<8x32xf32>
    %425 = math.tanh %424 : vector<8x32xf32>
    %426 = arith.mulf %419, %425 : vector<8x32xf32>
    %427 = vector.broadcast %c6_i32 : i32 to vector<8x1xi32>
    %428 = arith.cmpi slt, %427, %10 : vector<8x1xi32>
    %429 = arith.extui %428 : vector<8x1xi1> to vector<8x1xi32>
    %430 = arith.sitofp %429 : vector<8x1xi32> to vector<8x1xf32>
    %431 = vector.broadcast %380 : i32 to vector<8x1xi32>
    %432 = arith.cmpi slt, %431, %10 : vector<8x1xi32>
    %433 = arith.extui %432 : vector<8x1xi1> to vector<8x1xi32>
    %434 = arith.sitofp %433 : vector<8x1xi32> to vector<8x1xf32>
    %435 = vector.broadcast %430 : vector<8x1xf32> to vector<8x32xf32>
    %436 = arith.mulf %435, %410 : vector<8x32xf32>
    %437 = arith.addf %376, %436 : vector<8x32xf32>
    %438 = vector.broadcast %434 : vector<8x1xf32> to vector<8x32xf32>
    %439 = arith.mulf %438, %426 : vector<8x32xf32>
    %440 = arith.addf %379, %439 : vector<8x32xf32>
    %c7_i32_79 = arith.constant 7 : i32
    %c7_i32_80 = arith.constant 7 : i32
    %441 = arith.subi %c7_i32_80, %c7_i32_79 : i32
    %c8_i32_81 = arith.constant 8 : i32
    %442 = arith.muli %c7_i32_79, %c8_i32_81 : i32
    %443 = tpu.assume_multiple %442, 8 : i32
    %444 = arith.index_cast %443 : i32 to index
    %c0_82 = arith.constant 0 : index
    %445 = vector.load %arg10[%444, %c0_82] : memref<64x256xf32, #tpu.memory_space<vmem>>, vector<8x128xf32>
    %c8_i32_83 = arith.constant 8 : i32
    %446 = arith.muli %441, %c8_i32_83 : i32
    %447 = tpu.assume_multiple %446, 8 : i32
    %448 = arith.index_cast %447 : i32 to index
    %c128_84 = arith.constant 128 : index
    %449 = vector.load %arg10[%448, %c128_84] : memref<64x256xf32, #tpu.memory_space<vmem>>, vector<8x128xf32>
    %450 = arith.truncf %410 : vector<8x32xf32> to vector<8x32xbf16>
    %cst_85 = arith.constant dense<0.000000e+00> : vector<8x128xf32>
    %451 = tpu.matmul %450, %8, %cst_85 {dimension_numbers = #tpu.dot_dimension_numbers<[1], [0], [0], [1], [0, 0, 1, 1], [], []>} : vector<8x32xbf16>, vector<32x128xbf16>, vector<8x128xf32> -> vector<8x128xf32>
    %452 = arith.addf %445, %451 : vector<8x128xf32>
    %453 = arith.truncf %426 : vector<8x32xf32> to vector<8x32xbf16>
    %cst_86 = arith.constant dense<0.000000e+00> : vector<8x128xf32>
    %454 = tpu.matmul %453, %9, %cst_86 {dimension_numbers = #tpu.dot_dimension_numbers<[1], [0], [0], [1], [0, 0, 1, 1], [], []>} : vector<8x32xbf16>, vector<32x128xbf16>, vector<8x128xf32> -> vector<8x128xf32>
    %455 = arith.addf %449, %454 : vector<8x128xf32>
    %456 = vector.extract_strided_slice %452 {offsets = [0, 0], sizes = [8, 96], strides = [1, 1]} : vector<8x128xf32> to vector<8x96xf32>
    %457 = arith.negf %456 : vector<8x96xf32>
    %458 = math.exp %457 : vector<8x96xf32>
    %cst_87 = arith.constant 1.000000e+00 : f32
    %459 = vector.broadcast %cst_87 : f32 to vector<8x96xf32>
    %460 = arith.addf %459, %458 : vector<8x96xf32>
    %461 = arith.divf %459, %460 : vector<8x96xf32>
    %462 = vector.extract_strided_slice %461 {offsets = [0, 0], sizes = [8, 32], strides = [1, 1]} : vector<8x96xf32> to vector<8x32xf32>
    %463 = vector.extract_strided_slice %461 {offsets = [0, 32], sizes = [8, 32], strides = [1, 1]} : vector<8x96xf32> to vector<8x32xf32>
    %464 = vector.extract_strided_slice %461 {offsets = [0, 64], sizes = [8, 32], strides = [1, 1]} : vector<8x96xf32> to vector<8x32xf32>
    %465 = vector.extract_strided_slice %452 {offsets = [0, 96], sizes = [8, 32], strides = [1, 1]} : vector<8x128xf32> to vector<8x32xf32>
    %466 = math.tanh %465 : vector<8x32xf32>
    %467 = arith.mulf %463, %408 : vector<8x32xf32>
    %468 = arith.mulf %462, %466 : vector<8x32xf32>
    %469 = arith.addf %467, %468 : vector<8x32xf32>
    %470 = math.tanh %469 : vector<8x32xf32>
    %471 = arith.mulf %464, %470 : vector<8x32xf32>
    %472 = vector.extract_strided_slice %455 {offsets = [0, 0], sizes = [8, 96], strides = [1, 1]} : vector<8x128xf32> to vector<8x96xf32>
    %473 = arith.negf %472 : vector<8x96xf32>
    %474 = math.exp %473 : vector<8x96xf32>
    %cst_88 = arith.constant 1.000000e+00 : f32
    %475 = vector.broadcast %cst_88 : f32 to vector<8x96xf32>
    %476 = arith.addf %475, %474 : vector<8x96xf32>
    %477 = arith.divf %475, %476 : vector<8x96xf32>
    %478 = vector.extract_strided_slice %477 {offsets = [0, 0], sizes = [8, 32], strides = [1, 1]} : vector<8x96xf32> to vector<8x32xf32>
    %479 = vector.extract_strided_slice %477 {offsets = [0, 32], sizes = [8, 32], strides = [1, 1]} : vector<8x96xf32> to vector<8x32xf32>
    %480 = vector.extract_strided_slice %477 {offsets = [0, 64], sizes = [8, 32], strides = [1, 1]} : vector<8x96xf32> to vector<8x32xf32>
    %481 = vector.extract_strided_slice %455 {offsets = [0, 96], sizes = [8, 32], strides = [1, 1]} : vector<8x128xf32> to vector<8x32xf32>
    %482 = math.tanh %481 : vector<8x32xf32>
    %483 = arith.mulf %479, %424 : vector<8x32xf32>
    %484 = arith.mulf %478, %482 : vector<8x32xf32>
    %485 = arith.addf %483, %484 : vector<8x32xf32>
    %486 = math.tanh %485 : vector<8x32xf32>
    %487 = arith.mulf %480, %486 : vector<8x32xf32>
    %488 = vector.broadcast %c7_i32_79 : i32 to vector<8x1xi32>
    %489 = arith.cmpi slt, %488, %10 : vector<8x1xi32>
    %490 = arith.extui %489 : vector<8x1xi1> to vector<8x1xi32>
    %491 = arith.sitofp %490 : vector<8x1xi32> to vector<8x1xf32>
    %492 = vector.broadcast %441 : i32 to vector<8x1xi32>
    %493 = arith.cmpi slt, %492, %10 : vector<8x1xi32>
    %494 = arith.extui %493 : vector<8x1xi1> to vector<8x1xi32>
    %495 = arith.sitofp %494 : vector<8x1xi32> to vector<8x1xf32>
    %496 = vector.broadcast %491 : vector<8x1xf32> to vector<8x32xf32>
    %497 = arith.mulf %496, %471 : vector<8x32xf32>
    %498 = arith.addf %437, %497 : vector<8x32xf32>
    %499 = vector.broadcast %495 : vector<8x1xf32> to vector<8x32xf32>
    %500 = arith.mulf %499, %487 : vector<8x32xf32>
    %501 = arith.addf %440, %500 : vector<8x32xf32>
    %c8_i32_89 = arith.constant 8 : i32
    %c1_i32_90 = arith.constant 1 : i32
    %502 = vector.broadcast %c1_i32_90 : i32 to vector<8x1xi32>
    %503 = arith.maxsi %10, %502 : vector<8x1xi32>
    %504 = arith.sitofp %503 : vector<8x1xi32> to vector<8x1xf32>
    %505 = tpu.reciprocal %504 {approx = true} : vector<8x1xf32> -> vector<8x1xf32>
    %506 = vector.broadcast %505 : vector<8x1xf32> to vector<8x32xf32>
    %507 = arith.mulf %498, %506 : vector<8x32xf32>
    %c0_91 = arith.constant 0 : index
    %c0_92 = arith.constant 0 : index
    %508 = vector.load %arg9[%c0_91, %c0_92] : memref<8x64xf32, #tpu.memory_space<vmem>>, vector<8x32xf32>
    tpu.vector_store %arg9[%c0_91, %c0_92], %507 {strides = array<i32>} : memref<8x64xf32, #tpu.memory_space<vmem>>, vector<8x32xf32>,
    %509 = vector.broadcast %505 : vector<8x1xf32> to vector<8x32xf32>
    %510 = arith.mulf %501, %509 : vector<8x32xf32>
    %c0_93 = arith.constant 0 : index
    %c32 = arith.constant 32 : index
    %511 = vector.load %arg9[%c0_93, %c32] : memref<8x64xf32, #tpu.memory_space<vmem>>, vector<8x32xf32>
    tpu.vector_store %arg9[%c0_93, %c32], %510 {strides = array<i32>} : memref<8x64xf32, #tpu.memory_space<vmem>>, vector<8x32xf32>,
    return
  }
  func.func @transform_0(%arg0: i32) -> (i32, i32, i32) {
    %c0_i32 = arith.constant 0 : i32
    %c0_i32_0 = arith.constant 0 : i32
    %c0_i32_1 = arith.constant 0 : i32
    return %c0_i32, %arg0, %c0_i32_0 : i32, i32, i32
  }
  func.func @transform_1(%arg0: i32) -> (i32, i32) {
    %c0_i32 = arith.constant 0 : i32
    %c0_i32_0 = arith.constant 0 : i32
    return %arg0, %c0_i32 : i32, i32
  }
  func.func @transform_2(%arg0: i32) -> (i32, i32) {
    %c0_i32 = arith.constant 0 : i32
    %c0_i32_0 = arith.constant 0 : i32
    %c0_i32_1 = arith.constant 0 : i32
    return %c0_i32, %c0_i32_0 : i32, i32
  }
  func.func @transform_3(%arg0: i32) -> (i32, i32) {
    %c0_i32 = arith.constant 0 : i32
    %c0_i32_0 = arith.constant 0 : i32
    %c0_i32_1 = arith.constant 0 : i32
    return %c0_i32, %c0_i32_0 : i32, i32
  }
  func.func @transform_4(%arg0: i32) -> (i32, i32) {
    %c0_i32 = arith.constant 0 : i32
    %c0_i32_0 = arith.constant 0 : i32
    %c0_i32_1 = arith.constant 0 : i32
    return %c0_i32, %c0_i32_0 : i32, i32
  }
  func.func @transform_5(%arg0: i32) -> (i32, i32) {
    %c0_i32 = arith.constant 0 : i32
    %c0_i32_0 = arith.constant 0 : i32
    %c0_i32_1 = arith.constant 0 : i32
    return %c0_i32, %c0_i32_0 : i32, i32
  }
  func.func @transform_6(%arg0: i32) -> (i32, i32) {
    %c0_i32 = arith.constant 0 : i32
    %c0_i32_0 = arith.constant 0 : i32
    return %arg0, %c0_i32 : i32, i32
  }
  func.func @transform_7(%arg0: i32) -> (i32, i32) {
    %c0_i32 = arith.constant 0 : i32
    %c0_i32_0 = arith.constant 0 : i32
    return %arg0, %c0_i32 : i32, i32
  }
  func.func @transform_8(%arg0: i32) -> (i32, i32) {
    %c0_i32 = arith.constant 0 : i32
    %c0_i32_0 = arith.constant 0 : i32
    return %arg0, %c0_i32 : i32, i32
  }
}

</mosaic_0001>

<llo_original>
// kernel: tpu_custom_call.1
$region0: #{tpu_custom_call.1}
  #allocation0 [shape = 'u32[]', space=smem, size = 0x4, offset = 0x4, fixed_abs, tag = 'smem constant byte address 0x4 - core index']
  #allocation1 [shape = 'u32[144,128]{1,0:T(1,128)}', space=vmem, size = 0x12000, scoped, tag = 'internal scratch']
  #allocation2 [shape = 'f32[64,256]{1,0:T(8,128)}', space=vmem, size = 0x10000, scoped, tag = 'scratch operand']
  %s0 = inlined_call_operand.hbm [shape: bf16[8,8,16], index: 0, kind: input, shape index: {}]
  %s1 = inlined_call_operand.vmem [shape: s32[8,1], index: 1, kind: input, shape index: {}]
  %s2 = inlined_call_operand.vmem [shape: bf16[16,256], index: 2, kind: input, shape index: {}]
  %s3 = inlined_call_operand.hbm [shape: f32[1,256], index: 3, kind: input, shape index: {}]
  %s4 = inlined_call_operand.hbm [shape: bf16[32,128], index: 4, kind: input, shape index: {}]
  %s5 = inlined_call_operand.hbm [shape: bf16[32,128], index: 5, kind: input, shape index: {}]
  %s6 = inlined_call_operand.vmem [shape: f32[8,32], index: 6, kind: input, shape index: {}]
  %s7 = inlined_call_operand.vmem [shape: f32[8,32], index: 7, kind: input, shape index: {}]
  %s8 = inlined_call_operand.hbm [shape: f32[8,64], index: 8, kind: output, shape index: {}]
  %s9 = sld [smem:[#allocation0]]
  $region58: #{tpu_custom_call.1} parent=0
    _
  %s11 = ssub.s32 1, %s9
  %s12 = scalar_select 0, %s11, %s9
  $region1: #{tpu_custom_call.1} parent=0
    #allocation3 [shape = 'u8[16384]{0}', space=vmem, size = 0x4000, scoped, tag = 'input window, operand 0, single buffered']
    #allocation4 [shape = 's32[1]{0}', space=sflag, size = 0x4, scoped, tag = 'scoped memory for tpu_custom_call.1']
    #allocation5 [shape = 's32[1]{0}', space=sflag, size = 0x4, scoped, tag = 'scoped memory for tpu_custom_call.1']
    #allocation6 [shape = 'u8[1024]{0}', space=vmem, size = 0x400, scoped, tag = 'input window, operand 3, single buffered']
    #allocation7 [shape = 's32[1]{0}', space=sflag, size = 0x4, scoped, tag = 'scoped memory for tpu_custom_call.1']
    #allocation8 [shape = 'u8[8192]{0}', space=vmem, size = 0x2000, scoped, tag = 'input window, operand 4, single buffered']
    #allocation9 [shape = 'u8[8192]{0}', space=vmem, size = 0x2000, scoped, tag = 'input window, operand 5, single buffered']
    #allocation10 [shape = 's32[1]{0}', space=sflag, size = 0x4, scoped, tag = 'scoped memory for tpu_custom_call.1']
    #allocation11 [shape = 'u8[4096]{0}', space=vmem, size = 0x1000, scoped, tag = 'output window, operand 0, single buffered']
    %13 = vsyncpa [#allocation4], 0
    %14 = vsyncpa [#allocation7], 0
    %15 = vsyncpa [#allocation10], 0
    %16 = vsyncpa [#allocation5], 0
    // Predicated region
    $region2: #{tpu_custom_call.1} parent=1 // pred_check
      _
    $region3: #{tpu_custom_call.1} parent=1 // pred_check_branch
      %18 = sbr.rel (0) target = $region5
    $region4: #{tpu_custom_call.1} parent=1 // pred_region
      %s20 = ssub.s32 512, 512
      %21 = vsyncadd [#allocation4], %s20
      %s22 = sshll.u32 [#allocation3], 4
      %s23 = int_to_ptr.vmem [resolvable:$true] %s22
      %28 = dma.hbm_to_vmem [thread:$0]  %s0, 512, %s23, [#allocation4], 64, 64, 4
    $region5: #{tpu_custom_call.1} parent=1 // pred_fallthru
      _
    // Predicated region
    $region6: #{tpu_custom_call.1} parent=1 // pred_check
      _
    $region7: #{tpu_custom_call.1} parent=1 // pred_check_branch
      %30 = sbr.rel (0) target = $region9
    $region8: #{tpu_custom_call.1} parent=1 // pred_region
      _
    $region9: #{tpu_custom_call.1} parent=1 // pred_fallthru
      _
    // Predicated region
    $region10: #{tpu_custom_call.1} parent=1 // pred_check
      _
    $region11: #{tpu_custom_call.1} parent=1 // pred_check_branch
      %32 = sbr.rel (0) target = $region13
    $region12: #{tpu_custom_call.1} parent=1 // pred_region
      _
    $region13: #{tpu_custom_call.1} parent=1 // pred_fallthru
      _
    // Predicated region
    $region14: #{tpu_custom_call.1} parent=1 // pred_check
      _
    $region15: #{tpu_custom_call.1} parent=1 // pred_check_branch
      %34 = sbr.rel (0) target = $region17
    $region16: #{tpu_custom_call.1} parent=1 // pred_region
      %s36 = ssub.s32 32, 32
      %37 = vsyncadd [#allocation7], %s36
      %s39 = sshll.u32 [#allocation6], 4
      %s40 = int_to_ptr.vmem [resolvable:$true] %s39
      %42 = dma.hbm_to_vmem [thread:$0]  %s3, 32, %s40, [#allocation7]
    $region17: #{tpu_custom_call.1} parent=1 // pred_fallthru
      _
    // Predicated region
    $region18: #{tpu_custom_call.1} parent=1 // pred_check
      _
    $region19: #{tpu_custom_call.1} parent=1 // pred_check_branch
      %44 = sbr.rel (0) target = $region21
    $region20: #{tpu_custom_call.1} parent=1 // pred_region
      %s46 = ssub.s32 256, 256
      %47 = vsyncadd [#allocation7], %s46
      %s48 = sshll.u32 [#allocation8], 4
      %s49 = int_to_ptr.vmem [resolvable:$true] %s48
      %54 = dma.hbm_to_vmem [thread:$0]  %s4, 256, %s49, [#allocation7], 64, 64, 4
    $region21: #{tpu_custom_call.1} parent=1 // pred_fallthru
      _
    // Predicated region
    $region22: #{tpu_custom_call.1} parent=1 // pred_check
      _
    $region23: #{tpu_custom_call.1} parent=1 // pred_check_branch
      %56 = sbr.rel (0) target = $region25
    $region24: #{tpu_custom_call.1} parent=1 // pred_region
      %s58 = ssub.s32 256, 256
      %59 = vsyncadd [#allocation10], %s58
      %s60 = sshll.u32 [#allocation9], 4
      %s61 = int_to_ptr.vmem [resolvable:$true] %s60
      %66 = dma.hbm_to_vmem [thread:$0]  %s5, 256, %s61, [#allocation10], 64, 64, 4
    $region25: #{tpu_custom_call.1} parent=1 // pred_fallthru
      _
    // Predicated region
    $region26: #{tpu_custom_call.1} parent=1 // pred_check
      _
    $region27: #{tpu_custom_call.1} parent=1 // pred_check_branch
      %68 = sbr.rel (0) target = $region29
    $region28: #{tpu_custom_call.1} parent=1 // pred_region
      _
    $region29: #{tpu_custom_call.1} parent=1 // pred_fallthru
      _
    // Predicated region
    $region30: #{tpu_custom_call.1} parent=1 // pred_check
      _
    $region31: #{tpu_custom_call.1} parent=1 // pred_check_branch
      %70 = sbr.rel (0) target = $region33
    $region32: #{tpu_custom_call.1} parent=1 // pred_region
      _
    $region33: #{tpu_custom_call.1} parent=1 // pred_fallthru
      _
    // Predicated region
    $region34: #{tpu_custom_call.1} parent=1 // pred_check
      _
    $region35: #{tpu_custom_call.1} parent=1 // pred_check_branch
      %72 = sbr.rel (0) target = $region37
    $region36: #{tpu_custom_call.1} parent=1 // pred_region
      %73 = dma.done [#allocation4], 512
    $region37: #{tpu_custom_call.1} parent=1 // pred_fallthru
      _
    // Predicated region
    $region38: #{tpu_custom_call.1} parent=1 // pred_check
      _
    $region39: #{tpu_custom_call.1} parent=1 // pred_check_branch
      %75 = sbr.rel (0) target = $region41
    $region40: #{tpu_custom_call.1} parent=1 // pred_region
      %76 = dma.done [#allocation7], 32
    $region41: #{tpu_custom_call.1} parent=1 // pred_fallthru
      _
    // Predicated region
    $region42: #{tpu_custom_call.1} parent=1 // pred_check
      _
    $region43: #{tpu_custom_call.1} parent=1 // pred_check_branch
      %78 = sbr.rel (0) target = $region45
    $region44: #{tpu_custom_call.1} parent=1 // pred_region
      %79 = dma.done [#allocation7], 256
    $region45: #{tpu_custom_call.1} parent=1 // pred_fallthru
      _
    // Predicated region
    $region46: #{tpu_custom_call.1} parent=1 // pred_check
      _
    $region47: #{tpu_custom_call.1} parent=1 // pred_check_branch
      %81 = sbr.rel (0) target = $region49
    $region48: #{tpu_custom_call.1} parent=1 // pred_region
      %82 = dma.done [#allocation10], 256
    $region49: #{tpu_custom_call.1} parent=1 // pred_fallthru
      _
    %v84 = vld [vmem:[#allocation3] sm:$0xf]
    %v85 = vld [vmem:[#allocation3 + $0x4] sm:$0xf]
    %v86 = vld [vmem:[#allocation3 + $0x8] sm:$0xf]
    %v87 = vld [vmem:[#allocation3 + $0xc] sm:$0xf]
    %v88 = vld [vmem:[#allocation3 + $0x10] sm:$0xf]
    %v89 = vld [vmem:[#allocation3 + $0x14] sm:$0xf]
    %v90 = vld [vmem:[#allocation3 + $0x18] sm:$0xf]
    %v91 = vld [vmem:[#allocation3 + $0x1c] sm:$0xf]
    %v92 = vld [vmem:[%s2] sm:$0xff]
    %v93 = vld [vmem:[%s2 + $0x8] sm:$0xff]
    %v94 = vld [vmem:[#allocation6] sm:$0x3]
    %v96 = vlaneseq
    %v97 = vshrl.u32 %v96, 7
    %v98 = vsub.s32 0, %v97
    %v99 = vrot.slane %v94, %v98
    %v100 = vlaneseq
    %v101 = vshrl.u32 %v100, 7
    %v102 = vsub.s32 1, %v101
    %v103 = vrot.slane %v94, %v102
    %v114 = vunpack.c.l.b16 %v84
    %v115 = vunpack.c.l.b16 %v85
    %v116 = vunpack.c.l.b16 %v86
    %v117 = vunpack.c.l.b16 %v87
    %v118 = vunpack.c.l.b16 %v88
    %v119 = vunpack.c.l.b16 %v89
    %v120 = vunpack.c.l.b16 %v90
    %v121 = vunpack.c.l.b16 %v91
    %v122 = vpack.c.b16 %v115, %v114
    %v123 = vpack.c.b16 %v117, %v116
    %v124 = vpack.c.b16 %v119, %v118
    %v125 = vpack.c.b16 %v121, %v120
    %v128 = vunpack.c.l.b16 %v92
    %v129 = vunpack.c.h.b16 %v92
    %v130 = vunpack.c.l.b16 %v93
    %v131 = vunpack.c.h.b16 %v93
    %v132 = vpack.c.b16 %v130, %v128
    %v133 = vpack.c.b16 %v131, %v129
    %vm136 = vcmask 130048
    %v138 = vsel %vm136, %v122, 0
    %v141 = vsel %vm136, %v123, 0
    %v144 = vsel %vm136, %v124, 0
    %v147 = vsel %vm136, %v125, 0
    %149 = vmatprep.subr.bf16.mxu0 %v133
    %150 = vmatpush1.bf16.msra.mxu0 %v132
    %151 = vmatprep.subr.bf16.mxu0 0
    %152 = vmatpush1.bf16.msra.mxu0 0
    %153 = vmatprep.subr.bf16.mxu0 0
    %154 = vmatpush1.bf16.msra.mxu0 0
    %155 = vmatprep.subr.bf16.mxu0 0
    %156 = vmatpush1.bf16.msra.mxu0 0
    %157 = vmatprep.subr.bf16.mxu0 0
    %158 = vmatpush1.bf16.msra.mxu0 0
    %159 = vmatprep.subr.bf16.mxu0 0
    %160 = vmatpush1.bf16.msra.mxu0 0
    %161 = vmatprep.subr.bf16.mxu0 0
    %162 = vmatpush1.bf16.msra.mxu0 0
    %163 = vmatprep.subr.bf16.mxu0 0
    %164 = vmatpush1.bf16.msra.mxu0 0
    %165 = vmatprep.subr.bf16.mxu0 0
    %166 = vmatpush1.bf16.msra.mxu0 0
    %167 = vmatprep.subr.bf16.mxu0 0
    %168 = vmatpush1.bf16.msra.mxu0 0
    %169 = vmatprep.subr.bf16.mxu0 0
    %170 = vmatpush1.bf16.msra.mxu0 0
    %171 = vmatprep.subr.bf16.mxu0 0
    %172 = vmatpush1.bf16.msra.mxu0 0
    %173 = vmatprep.subr.bf16.mxu0 0
    %174 = vmatpush1.bf16.msra.mxu0 0
    %175 = vmatprep.subr.bf16.mxu0 0
    %176 = vmatpush1.bf16.msra.mxu0 0
    %177 = vmatprep.subr.bf16.mxu0 0
    %178 = vmatpush1.bf16.msra.mxu0 0
    %179 = vmatprep.subr.bf16.mxu0 0
    %180 = vmatpush1.bf16.msra.mxu0 0
    %181 = vmatprep.mubr.bf16.mxu0 0
    %182 = vmatmul.mubr.bf16.gmra.mrb[0].mxu0 %v138
    %v183 = vpop.f32.mrb[0].mxu0
    %v184 = vadd.f32 %v99, %v183
    %v185 = vpop.f32.mrb[0].mxu0
    %v186 = vadd.f32 %v103, %v185
    %v187 = vpop.f32.mrb[0].mxu0
    %v188 = vadd.f32 %v99, %v187
    %v189 = vpop.f32.mrb[0].mxu0
    %v190 = vadd.f32 %v103, %v189
    %191 = vmatprep.mubr.bf16.mxu0 0
    %192 = vmatmul.mubr.bf16.gmra.mrb[0].mxu0 %v141
    %v193 = vpop.f32.mrb[0].mxu0
    %v194 = vadd.f32 %v99, %v193
    %v195 = vpop.f32.mrb[0].mxu0
    %v196 = vadd.f32 %v103, %v195
    %v197 = vpop.f32.mrb[0].mxu0
    %v198 = vadd.f32 %v99, %v197
    %v199 = vpop.f32.mrb[0].mxu0
    %v200 = vadd.f32 %v103, %v199
    %201 = vmatprep.mubr.bf16.mxu0 0
    %202 = vmatmul.mubr.bf16.gmra.mrb[0].mxu0 %v144
    %v203 = vpop.f32.mrb[0].mxu0
    %v204 = vadd.f32 %v99, %v203
    %v205 = vpop.f32.mrb[0].mxu0
    %v206 = vadd.f32 %v103, %v205
    %v207 = vpop.f32.mrb[0].mxu0
    %v208 = vadd.f32 %v99, %v207
    %v209 = vpop.f32.mrb[0].mxu0
    %v210 = vadd.f32 %v103, %v209
    %211 = vmatprep.mubr.bf16.mxu0 0
    %212 = vmatmul.mubr.bf16.gmra.mrb[0].mxu0 %v147
    %v213 = vpop.f32.mrb[0].mxu0
    %v214 = vadd.f32 %v99, %v213
    %v215 = vpop.f32.mrb[0].mxu0
    %v216 = vadd.f32 %v103, %v215
    %v217 = vpop.f32.mrb[0].mxu0
    %v218 = vadd.f32 %v99, %v217
    %v219 = vpop.f32.mrb[0].mxu0
    %v220 = vadd.f32 %v103, %v219
    %221 = vdwg.mxu0
    %222 = vst [vmem:[#allocation2] sm:$0xff] %v184
    %223 = vst [vmem:[#allocation2 + $0x8] sm:$0xff] %v186
    %224 = vst [vmem:[#allocation2 + $0x10] sm:$0xff] %v188
    %225 = vst [vmem:[#allocation2 + $0x18] sm:$0xff] %v190
    %226 = vst [vmem:[#allocation2 + $0x20] sm:$0xff] %v194
    %227 = vst [vmem:[#allocation2 + $0x28] sm:$0xff] %v196
    %228 = vst [vmem:[#allocation2 + $0x30] sm:$0xff] %v198
    %229 = vst [vmem:[#allocation2 + $0x38] sm:$0xff] %v200
    %230 = vst [vmem:[#allocation2 + $0x40] sm:$0xff] %v204
    %231 = vst [vmem:[#allocation2 + $0x48] sm:$0xff] %v206
    %232 = vst [vmem:[#allocation2 + $0x50] sm:$0xff] %v208
    %233 = vst [vmem:[#allocation2 + $0x58] sm:$0xff] %v210
    %234 = vst [vmem:[#allocation2 + $0x60] sm:$0xff] %v214
    %235 = vst [vmem:[#allocation2 + $0x68] sm:$0xff] %v216
    %236 = vst [vmem:[#allocation2 + $0x70] sm:$0xff] %v218
    %237 = vst [vmem:[#allocation2 + $0x78] sm:$0xff] %v220
    %v238 = vld [vmem:[#allocation8] sm:$0xf]
    %v239 = vld [vmem:[#allocation8 + $0x4] sm:$0xf]
    %v240 = vld [vmem:[#allocation8 + $0x8] sm:$0xf]
    %v241 = vld [vmem:[#allocation8 + $0xc] sm:$0xf]
    %v242 = vld [vmem:[#allocation9] sm:$0xf]
    %v243 = vld [vmem:[#allocation9 + $0x4] sm:$0xf]
    %v244 = vld [vmem:[#allocation9 + $0x8] sm:$0xf]
    %v245 = vld [vmem:[#allocation9 + $0xc] sm:$0xf]
    %v246 = vld [vmem:[%s1] sm:$0xff]
    %v247 = vld [vmem:[%s6] sm:$0xff]
    %v248 = vld [vmem:[%s7] sm:$0xff]
    %s249 = smul.u32 0, 2
    %s250 = smul.addr %s249, 8
    %s251 = scalar_lea.vmem [#allocation2], %s250
    %v252 = vld [vmem:[%s251] sm:$0xff]
    %s253 = smul.u32 7, 2
    %s254 = smul.addr %s253, 8
    %s255 = scalar_lea.vmem [#allocation2], %s254
    %v256 = vld [vmem:[%s255 + $0x8] sm:$0xff]
    %v261 = vunpack.c.l.b16 %v238
    %v262 = vunpack.c.l.b16 %v239
    %v263 = vunpack.c.l.b16 %v240
    %v264 = vunpack.c.l.b16 %v241
    %v265 = vpack.c.b16 %v262, %v261
    %v266 = vpack.c.b16 %v264, %v263
    %vm269 = vcmask 261120
    %v271 = vsel %vm269, 0, 0
    %273 = vmatprep.subr.bf16.mxu0 0
    %274 = vmatpush1.bf16.msra.mxu0 %v265
    %275 = vmatprep.subr.bf16.mxu0 0
    %276 = vmatpush1.bf16.msra.mxu0 %v266
    %277 = vmatprep.subr.bf16.mxu0 0
    %278 = vmatpush1.bf16.msra.mxu0 0
    %279 = vmatprep.subr.bf16.mxu0 0
    %280 = vmatpush1.bf16.msra.mxu0 0
    %281 = vmatprep.subr.bf16.mxu0 0
    %282 = vmatpush1.bf16.msra.mxu0 0
    %283 = vmatprep.subr.bf16.mxu0 0
    %284 = vmatpush1.bf16.msra.mxu0 0
    %285 = vmatprep.subr.bf16.mxu0 0
    %286 = vmatpush1.bf16.msra.mxu0 0
    %287 = vmatprep.subr.bf16.mxu0 0
    %288 = vmatpush1.bf16.msra.mxu0 0
    %289 = vmatprep.subr.bf16.mxu0 0
    %290 = vmatpush1.bf16.msra.mxu0 0
    %291 = vmatprep.subr.bf16.mxu0 0
    %292 = vmatpush1.bf16.msra.mxu0 0
    %293 = vmatprep.subr.bf16.mxu0 0
    %294 = vmatpush1.bf16.msra.mxu0 0
    %295 = vmatprep.subr.bf16.mxu0 0
    %296 = vmatpush1.bf16.msra.mxu0 0
    %297 = vmatprep.subr.bf16.mxu0 0
    %298 = vmatpush1.bf16.msra.mxu0 0
    %299 = vmatprep.subr.bf16.mxu0 0
    %300 = vmatpush1.bf16.msra.mxu0 0
    %301 = vmatprep.subr.bf16.mxu0 0
    %302 = vmatpush1.bf16.msra.mxu0 0
    %303 = vmatprep.subr.bf16.mxu0 0
    %304 = vmatpush1.bf16.msra.mxu0 0
    %305 = vmatprep.mubr.bf16.mxu0 0
    %306 = vmatmul.mubr.bf16.gmra.mrb[0].mxu0 %v271
    %v307 = vpop.f32.mrb[0].mxu0
    %v308 = vadd.f32 0.0, %v307
    %v309 = vpop.f32.mrb[0].mxu0
    %v310 = vpop.f32.mrb[0].mxu0
    %v311 = vpop.f32.mrb[0].mxu0
    %312 = vdwg.mxu0
    %v313 = vadd.f32 %v252, %v308
    %v318 = vunpack.c.l.b16 %v242
    %v319 = vunpack.c.l.b16 %v243
    %v320 = vunpack.c.l.b16 %v244
    %v321 = vunpack.c.l.b16 %v245
    %v322 = vpack.c.b16 %v319, %v318
    %v323 = vpack.c.b16 %v321, %v320
    %326 = vmatprep.subr.bf16.mxu0 0
    %327 = vmatpush1.bf16.msra.mxu0 %v322
    %328 = vmatprep.subr.bf16.mxu0 0
    %329 = vmatpush1.bf16.msra.mxu0 %v323
    %330 = vmatprep.subr.bf16.mxu0 0
    %331 = vmatpush1.bf16.msra.mxu0 0
    %332 = vmatprep.subr.bf16.mxu0 0
    %333 = vmatpush1.bf16.msra.mxu0 0
    %334 = vmatprep.subr.bf16.mxu0 0
    %335 = vmatpush1.bf16.msra.mxu0 0
    %336 = vmatprep.subr.bf16.mxu0 0
    %337 = vmatpush1.bf16.msra.mxu0 0
    %338 = vmatprep.subr.bf16.mxu0 0
    %339 = vmatpush1.bf16.msra.mxu0 0
    %340 = vmatprep.subr.bf16.mxu0 0
    %341 = vmatpush1.bf16.msra.mxu0 0
    %342 = vmatprep.subr.bf16.mxu0 0
    %343 = vmatpush1.bf16.msra.mxu0 0
    %344 = vmatprep.subr.bf16.mxu0 0
    %345 = vmatpush1.bf16.msra.mxu0 0
    %346 = vmatprep.subr.bf16.mxu0 0
    %347 = vmatpush1.bf16.msra.mxu0 0
    %348 = vmatprep.subr.bf16.mxu0 0
    %349 = vmatpush1.bf16.msra.mxu0 0
    %350 = vmatprep.subr.bf16.mxu0 0
    %351 = vmatpush1.bf16.msra.mxu0 0
    %352 = vmatprep.subr.bf16.mxu0 0
    %353 = vmatpush1.bf16.msra.mxu0 0
    %354 = vmatprep.subr.bf16.mxu0 0
    %355 = vmatpush1.bf16.msra.mxu0 0
    %356 = vmatprep.subr.bf16.mxu0 0
    %357 = vmatpush1.bf16.msra.mxu0 0
    %358 = vmatprep.mubr.bf16.mxu0 0
    %359 = vmatmul.mubr.bf16.gmra.mrb[0].mxu0 %v271
    %v360 = vpop.f32.mrb[0].mxu0
    %v361 = vadd.f32 0.0, %v360
    %v362 = vpop.f32.mrb[0].mxu0
    %v363 = vpop.f32.mrb[0].mxu0
    %v364 = vpop.f32.mrb[0].mxu0
    %365 = vdwg.mxu0
    %v366 = vadd.f32 %v256, %v361
    %v367 = vxor.u32 %v313, 2147483648
    %v368 = vmul.f32 %v367, 1.442695
    %v369 = vpow.pop %v368
    %v370 = vadd.f32 %v369, 1.0
    %v371 = vrcp.pop %v370
    %v372 = vmul.f32 1.0, %v371
    %v373 = vtanh.pop %v313
    %375 = vrot.lane.b32.xlu0 %v247, 32
    %v376 = vpop.permute.xlu0 %375
    %v378 = vmul.f32 %v372, %v376
    %380 = vrot.lane.b32.xlu0 %v373, 32
    %v381 = vpop.permute.xlu0 %380
    %v383 = vmul.f32 %v372, %v381
    %385 = vrot.lane.b32.xlu0 %v383, 32
    %v386 = vpop.permute.xlu0 %385
    %v388 = vadd.f32 %v378, %v386
    %v389 = vtanh.pop %v388
    %391 = vrot.lane.b32.xlu0 %v389, 32
    %v392 = vpop.permute.xlu0 %391
    %v394 = vmul.f32 %v372, %v392
    %v395 = vxor.u32 %v366, 2147483648
    %v396 = vmul.f32 %v395, 1.442695
    %v397 = vpow.pop %v396
    %v398 = vadd.f32 %v397, 1.0
    %v399 = vrcp.pop %v398
    %v400 = vmul.f32 1.0, %v399
    %v401 = vtanh.pop %v366
    %403 = vrot.lane.b32.xlu0 %v248, 32
    %v404 = vpop.permute.xlu0 %403
    %v406 = vmul.f32 %v400, %v404
    %408 = vrot.lane.b32.xlu0 %v401, 32
    %v409 = vpop.permute.xlu0 %408
    %v411 = vmul.f32 %v400, %v409
    %413 = vrot.lane.b32.xlu0 %v411, 32
    %v414 = vpop.permute.xlu0 %413
    %v416 = vadd.f32 %v406, %v414
    %v417 = vtanh.pop %v416
    %419 = vrot.lane.b32.xlu0 %v417, 32
    %v420 = vpop.permute.xlu0 %419
    %v422 = vmul.f32 %v400, %v420
    %vm423 = vcmp.gt.s32.totalorder %v246, 0
    %v424 = vsel %vm423, 1, 0
    %v425 = vcvt.s32.f32 %v424
    %vm426 = vcmp.gt.s32.totalorder %v246, 7
    %v427 = vsel %vm426, 1, 0
    %v428 = vcvt.s32.f32 %v427
    %430 = vset.pattern.permute.xlu0 0
    %431 = vperm.xlu0 %430, %v425
    %v432 = vpop.permute.xlu0 %431
    %v434 = vmul.f32 %v432, %v394
    %v435 = vadd.f32 %v434, 0.0
    %437 = vset.pattern.permute.xlu0 0
    %438 = vperm.xlu0 %437, %v428
    %v439 = vpop.permute.xlu0 %438
    %v441 = vmul.f32 %v439, %v422
    %v442 = vadd.f32 %v441, 0.0
    %s443 = smul.u32 1, 2
    %s444 = smul.addr %s443, 8
    %s445 = scalar_lea.vmem [#allocation2], %s444
    %v446 = vld [vmem:[%s445] sm:$0xff]
    %s447 = smul.u32 6, 2
    %s448 = smul.addr %s447, 8
    %s449 = scalar_lea.vmem [#allocation2], %s448
    %v450 = vld [vmem:[%s449 + $0x8] sm:$0xff]
    %v451 = vpack.c.bf16 %v394, %v394
    %453 = vrot.lane.b32.xlu0 %v451, 64
    %v454 = vpop.permute.xlu0 %453
    %v456 = vsel %vm269, %v454, 0
    %458 = vmatprep.subr.bf16.mxu0 0
    %459 = vmatpush1.bf16.msra.mxu0 %v265
    %460 = vmatprep.subr.bf16.mxu0 0
    %461 = vmatpush1.bf16.msra.mxu0 %v266
    %462 = vmatprep.subr.bf16.mxu0 0
    %463 = vmatpush1.bf16.msra.mxu0 0
    %464 = vmatprep.subr.bf16.mxu0 0
    %465 = vmatpush1.bf16.msra.mxu0 0
    %466 = vmatprep.subr.bf16.mxu0 0
    %467 = vmatpush1.bf16.msra.mxu0 0
    %468 = vmatprep.subr.bf16.mxu0 0
    %469 = vmatpush1.bf16.msra.mxu0 0
    %470 = vmatprep.subr.bf16.mxu0 0
    %471 = vmatpush1.bf16.msra.mxu0 0
    %472 = vmatprep.subr.bf16.mxu0 0
    %473 = vmatpush1.bf16.msra.mxu0 0
    %474 = vmatprep.subr.bf16.mxu0 0
    %475 = vmatpush1.bf16.msra.mxu0 0
    %476 = vmatprep.subr.bf16.mxu0 0
    %477 = vmatpush1.bf16.msra.mxu0 0
    %478 = vmatprep.subr.bf16.mxu0 0
    %479 = vmatpush1.bf16.msra.mxu0 0
    %480 = vmatprep.subr.bf16.mxu0 0
    %481 = vmatpush1.bf16.msra.mxu0 0
    %482 = vmatprep.subr.bf16.mxu0 0
    %483 = vmatpush1.bf16.msra.mxu0 0
    %484 = vmatprep.subr.bf16.mxu0 0
    %485 = vmatpush1.bf16.msra.mxu0 0
    %486 = vmatprep.subr.bf16.mxu0 0
    %487 = vmatpush1.bf16.msra.mxu0 0
    %488 = vmatprep.subr.bf16.mxu0 0
    %489 = vmatpush1.bf16.msra.mxu0 0
    %490 = vmatprep.mubr.bf16.mxu0 0
    %491 = vmatmul.mubr.bf16.gmra.mrb[0].mxu0 %v456
    %v492 = vpop.f32.mrb[0].mxu0
    %v493 = vadd.f32 0.0, %v492
    %v494 = vpop.f32.mrb[0].mxu0
    %v495 = vpop.f32.mrb[0].mxu0
    %v496 = vpop.f32.mrb[0].mxu0
    %497 = vdwg.mxu0
    %v498 = vadd.f32 %v446, %v493
    %v499 = vpack.c.bf16 %v422, %v422
    %501 = vrot.lane.b32.xlu0 %v499, 64
    %v502 = vpop.permute.xlu0 %501
    %v504 = vsel %vm269, %v502, 0
    %506 = vmatprep.subr.bf16.mxu0 0
    %507 = vmatpush1.bf16.msra.mxu0 %v322
    %508 = vmatprep.subr.bf16.mxu0 0
    %509 = vmatpush1.bf16.msra.mxu0 %v323
    %510 = vmatprep.subr.bf16.mxu0 0
    %511 = vmatpush1.bf16.msra.mxu0 0
    %512 = vmatprep.subr.bf16.mxu0 0
    %513 = vmatpush1.bf16.msra.mxu0 0
    %514 = vmatprep.subr.bf16.mxu0 0
    %515 = vmatpush1.bf16.msra.mxu0 0
    %516 = vmatprep.subr.bf16.mxu0 0
    %517 = vmatpush1.bf16.msra.mxu0 0
    %518 = vmatprep.subr.bf16.mxu0 0
    %519 = vmatpush1.bf16.msra.mxu0 0
    %520 = vmatprep.subr.bf16.mxu0 0
    %521 = vmatpush1.bf16.msra.mxu0 0
    %522 = vmatprep.subr.bf16.mxu0 0
    %523 = vmatpush1.bf16.msra.mxu0 0
    %524 = vmatprep.subr.bf16.mxu0 0
    %525 = vmatpush1.bf16.msra.mxu0 0
    %526 = vmatprep.subr.bf16.mxu0 0
    %527 = vmatpush1.bf16.msra.mxu0 0
    %528 = vmatprep.subr.bf16.mxu0 0
    %529 = vmatpush1.bf16.msra.mxu0 0
    %530 = vmatprep.subr.bf16.mxu0 0
    %531 = vmatpush1.bf16.msra.mxu0 0
    %532 = vmatprep.subr.bf16.mxu0 0
    %533 = vmatpush1.bf16.msra.mxu0 0
    %534 = vmatprep.subr.bf16.mxu0 0
    %535 = vmatpush1.bf16.msra.mxu0 0
    %536 = vmatprep.subr.bf16.mxu0 0
    %537 = vmatpush1.bf16.msra.mxu0 0
    %538 = vmatprep.mubr.bf16.mxu0 0
    %539 = vmatmul.mubr.bf16.gmra.mrb[0].mxu0 %v504
    %v540 = vpop.f32.mrb[0].mxu0
    %v541 = vadd.f32 0.0, %v540
    %v542 = vpop.f32.mrb[0].mxu0
    %v543 = vpop.f32.mrb[0].mxu0
    %v544 = vpop.f32.mrb[0].mxu0
    %545 = vdwg.mxu0
    %v546 = vadd.f32 %v450, %v541
    %v547 = vxor.u32 %v498, 2147483648
    %v548 = vmul.f32 %v547, 1.442695
    %v549 = vpow.pop %v548
    %v550 = vadd.f32 %v549, 1.0
    %v551 = vrcp.pop %v550
    %v552 = vmul.f32 1.0, %v551
    %v553 = vtanh.pop %v498
    %v554 = vmul.f32 %v552, %v388
    %556 = vrot.lane.b32.xlu0 %v553, 32
    %v557 = vpop.permute.xlu0 %556
    %v559 = vmul.f32 %v552, %v557
    %561 = vrot.lane.b32.xlu0 %v559, 32
    %v562 = vpop.permute.xlu0 %561
    %v564 = vadd.f32 %v554, %v562
    %v565 = vtanh.pop %v564
    %567 = vrot.lane.b32.xlu0 %v565, 32
    %v568 = vpop.permute.xlu0 %567
    %v570 = vmul.f32 %v552, %v568
    %v571 = vxor.u32 %v546, 2147483648
    %v572 = vmul.f32 %v571, 1.442695
    %v573 = vpow.pop %v572
    %v574 = vadd.f32 %v573, 1.0
    %v575 = vrcp.pop %v574
    %v576 = vmul.f32 1.0, %v575
    %v577 = vtanh.pop %v546
    %v578 = vmul.f32 %v576, %v416
    %580 = vrot.lane.b32.xlu0 %v577, 32
    %v581 = vpop.permute.xlu0 %580
    %v583 = vmul.f32 %v576, %v581
    %585 = vrot.lane.b32.xlu0 %v583, 32
    %v586 = vpop.permute.xlu0 %585
    %v588 = vadd.f32 %v578, %v586
    %v589 = vtanh.pop %v588
    %591 = vrot.lane.b32.xlu0 %v589, 32
    %v592 = vpop.permute.xlu0 %591
    %v594 = vmul.f32 %v576, %v592
    %vm595 = vcmp.gt.s32.totalorder %v246, 1
    %v596 = vsel %vm595, 1, 0
    %v597 = vcvt.s32.f32 %v596
    %vm598 = vcmp.gt.s32.totalorder %v246, 6
    %v599 = vsel %vm598, 1, 0
    %v600 = vcvt.s32.f32 %v599
    %602 = vset.pattern.permute.xlu0 0
    %603 = vperm.xlu0 %602, %v597
    %v604 = vpop.permute.xlu0 %603
    %v606 = vmul.f32 %v604, %v570
    %v607 = vadd.f32 %v435, %v606
    %609 = vset.pattern.permute.xlu0 0
    %610 = vperm.xlu0 %609, %v600
    %v611 = vpop.permute.xlu0 %610
    %v613 = vmul.f32 %v611, %v594
    %v614 = vadd.f32 %v442, %v613
    %s615 = smul.u32 2, 2
    %s616 = smul.addr %s615, 8
    %s617 = scalar_lea.vmem [#allocation2], %s616
    %v618 = vld [vmem:[%s617] sm:$0xff]
    %s619 = smul.u32 5, 2
    %s620 = smul.addr %s619, 8
    %s621 = scalar_lea.vmem [#allocation2], %s620
    %v622 = vld [vmem:[%s621 + $0x8] sm:$0xff]
    %v623 = vpack.c.bf16 %v570, %v570
    %625 = vrot.lane.b32.xlu0 %v623, 64
    %v626 = vpop.permute.xlu0 %625
    %v628 = vsel %vm269, %v626, 0
    %630 = vmatprep.subr.bf16.mxu0 0
    %631 = vmatpush1.bf16.msra.mxu0 %v265
    %632 = vmatprep.subr.bf16.mxu0 0
    %633 = vmatpush1.bf16.msra.mxu0 %v266
    %634 = vmatprep.subr.bf16.mxu0 0
    %635 = vmatpush1.bf16.msra.mxu0 0
    %636 = vmatprep.subr.bf16.mxu0 0
    %637 = vmatpush1.bf16.msra.mxu0 0
    %638 = vmatprep.subr.bf16.mxu0 0
    %639 = vmatpush1.bf16.msra.mxu0 0
    %640 = vmatprep.subr.bf16.mxu0 0
    %641 = vmatpush1.bf16.msra.mxu0 0
    %642 = vmatprep.subr.bf16.mxu0 0
    %643 = vmatpush1.bf16.msra.mxu0 0
    %644 = vmatprep.subr.bf16.mxu0 0
    %645 = vmatpush1.bf16.msra.mxu0 0
    %646 = vmatprep.subr.bf16.mxu0 0
    %647 = vmatpush1.bf16.msra.mxu0 0
    %648 = vmatprep.subr.bf16.mxu0 0
    %649 = vmatpush1.bf16.msra.mxu0 0
    %650 = vmatprep.subr.bf16.mxu0 0
    %651 = vmatpush1.bf16.msra.mxu0 0
    %652 = vmatprep.subr.bf16.mxu0 0
    %653 = vmatpush1.bf16.msra.mxu0 0
    %654 = vmatprep.subr.bf16.mxu0 0
    %655 = vmatpush1.bf16.msra.mxu0 0
    %656 = vmatprep.subr.bf16.mxu0 0
    %657 = vmatpush1.bf16.msra.mxu0 0
    %658 = vmatprep.subr.bf16.mxu0 0
    %659 = vmatpush1.bf16.msra.mxu0 0
    %660 = vmatprep.subr.bf16.mxu0 0
    %661 = vmatpush1.bf16.msra.mxu0 0
    %662 = vmatprep.mubr.bf16.mxu0 0
    %663 = vmatmul.mubr.bf16.gmra.mrb[0].mxu0 %v628
    %v664 = vpop.f32.mrb[0].mxu0
    %v665 = vadd.f32 0.0, %v664
    %v666 = vpop.f32.mrb[0].mxu0
    %v667 = vpop.f32.mrb[0].mxu0
    %v668 = vpop.f32.mrb[0].mxu0
    %669 = vdwg.mxu0
    %v670 = vadd.f32 %v618, %v665
    %v671 = vpack.c.bf16 %v594, %v594
    %673 = vrot.lane.b32.xlu0 %v671, 64
    %v674 = vpop.permute.xlu0 %673
    %v676 = vsel %vm269, %v674, 0
    %678 = vmatprep.subr.bf16.mxu0 0
    %679 = vmatpush1.bf16.msra.mxu0 %v322
    %680 = vmatprep.subr.bf16.mxu0 0
    %681 = vmatpush1.bf16.msra.mxu0 %v323
    %682 = vmatprep.subr.bf16.mxu0 0
    %683 = vmatpush1.bf16.msra.mxu0 0
    %684 = vmatprep.subr.bf16.mxu0 0
    %685 = vmatpush1.bf16.msra.mxu0 0
    %686 = vmatprep.subr.bf16.mxu0 0
    %687 = vmatpush1.bf16.msra.mxu0 0
    %688 = vmatprep.subr.bf16.mxu0 0
    %689 = vmatpush1.bf16.msra.mxu0 0
    %690 = vmatprep.subr.bf16.mxu0 0
    %691 = vmatpush1.bf16.msra.mxu0 0
    %692 = vmatprep.subr.bf16.mxu0 0
    %693 = vmatpush1.bf16.msra.mxu0 0
    %694 = vmatprep.subr.bf16.mxu0 0
    %695 = vmatpush1.bf16.msra.mxu0 0
    %696 = vmatprep.subr.bf16.mxu0 0
    %697 = vmatpush1.bf16.msra.mxu0 0
    %698 = vmatprep.subr.bf16.mxu0 0
    %699 = vmatpush1.bf16.msra.mxu0 0
    %700 = vmatprep.subr.bf16.mxu0 0
    %701 = vmatpush1.bf16.msra.mxu0 0
    %702 = vmatprep.subr.bf16.mxu0 0
    %703 = vmatpush1.bf16.msra.mxu0 0
    %704 = vmatprep.subr.bf16.mxu0 0
    %705 = vmatpush1.bf16.msra.mxu0 0
    %706 = vmatprep.subr.bf16.mxu0 0
    %707 = vmatpush1.bf16.msra.mxu0 0
    %708 = vmatprep.subr.bf16.mxu0 0
    %709 = vmatpush1.bf16.msra.mxu0 0
    %710 = vmatprep.mubr.bf16.mxu0 0
    %711 = vmatmul.mubr.bf16.gmra.mrb[0].mxu0 %v676
    %v712 = vpop.f32.mrb[0].mxu0
    %v713 = vadd.f32 0.0, %v712
    %v714 = vpop.f32.mrb[0].mxu0
    %v715 = vpop.f32.mrb[0].mxu0
    %v716 = vpop.f32.mrb[0].mxu0
    %717 = vdwg.mxu0
    %v718 = vadd.f32 %v622, %v713
    %v719 = vxor.u32 %v670, 2147483648
    %v720 = vmul.f32 %v719, 1.442695
    %v721 = vpow.pop %v720
    %v722 = vadd.f32 %v721, 1.0
    %v723 = vrcp.pop %v722
    %v724 = vmul.f32 1.0, %v723
    %v725 = vtanh.pop %v670
    %v726 = vmul.f32 %v724, %v564
    %728 = vrot.lane.b32.xlu0 %v725, 32
    %v729 = vpop.permute.xlu0 %728
    %v731 = vmul.f32 %v724, %v729
    %733 = vrot.lane.b32.xlu0 %v731, 32
    %v734 = vpop.permute.xlu0 %733
    %v736 = vadd.f32 %v726, %v734
    %v737 = vtanh.pop %v736
    %739 = vrot.lane.b32.xlu0 %v737, 32
    %v740 = vpop.permute.xlu0 %739
    %v742 = vmul.f32 %v724, %v740
    %v743 = vxor.u32 %v718, 2147483648
    %v744 = vmul.f32 %v743, 1.442695
    %v745 = vpow.pop %v744
    %v746 = vadd.f32 %v745, 1.0
    %v747 = vrcp.pop %v746
    %v748 = vmul.f32 1.0, %v747
    %v749 = vtanh.pop %v718
    %v750 = vmul.f32 %v748, %v588
    %752 = vrot.lane.b32.xlu0 %v749, 32
    %v753 = vpop.permute.xlu0 %752
    %v755 = vmul.f32 %v748, %v753
    %757 = vrot.lane.b32.xlu0 %v755, 32
    %v758 = vpop.permute.xlu0 %757
    %v760 = vadd.f32 %v750, %v758
    %v761 = vtanh.pop %v760
    %763 = vrot.lane.b32.xlu0 %v761, 32
    %v764 = vpop.permute.xlu0 %763
    %v766 = vmul.f32 %v748, %v764
    %vm767 = vcmp.gt.s32.totalorder %v246, 2
    %v768 = vsel %vm767, 1, 0
    %v769 = vcvt.s32.f32 %v768
    %vm770 = vcmp.gt.s32.totalorder %v246, 5
    %v771 = vsel %vm770, 1, 0
    %v772 = vcvt.s32.f32 %v771
    %774 = vset.pattern.permute.xlu0 0
    %775 = vperm.xlu0 %774, %v769
    %v776 = vpop.permute.xlu0 %775
    %v778 = vmul.f32 %v776, %v742
    %v779 = vadd.f32 %v607, %v778
    %781 = vset.pattern.permute.xlu0 0
    %782 = vperm.xlu0 %781, %v772
    %v783 = vpop.permute.xlu0 %782
    %v785 = vmul.f32 %v783, %v766
    %v786 = vadd.f32 %v614, %v785
    %s787 = smul.u32 3, 2
    %s788 = smul.addr %s787, 8
    %s789 = scalar_lea.vmem [#allocation2], %s788
    %v790 = vld [vmem:[%s789] sm:$0xff]
    %s791 = smul.u32 4, 2
    %s792 = smul.addr %s791, 8
    %s793 = scalar_lea.vmem [#allocation2], %s792
    %v794 = vld [vmem:[%s793 + $0x8] sm:$0xff]
    %v795 = vpack.c.bf16 %v742, %v742
    %797 = vrot.lane.b32.xlu0 %v795, 64
    %v798 = vpop.permute.xlu0 %797
    %v800 = vsel %vm269, %v798, 0
    %802 = vmatprep.subr.bf16.mxu0 0
    %803 = vmatpush1.bf16.msra.mxu0 %v265
    %804 = vmatprep.subr.bf16.mxu0 0
    %805 = vmatpush1.bf16.msra.mxu0 %v266
    %806 = vmatprep.subr.bf16.mxu0 0
    %807 = vmatpush1.bf16.msra.mxu0 0
    %808 = vmatprep.subr.bf16.mxu0 0
    %809 = vmatpush1.bf16.msra.mxu0 0
    %810 = vmatprep.subr.bf16.mxu0 0
    %811 = vmatpush1.bf16.msra.mxu0 0
    %812 = vmatprep.subr.bf16.mxu0 0
    %813 = vmatpush1.bf16.msra.mxu0 0
    %814 = vmatprep.subr.bf16.mxu0 0
    %815 = vmatpush1.bf16.msra.mxu0 0
    %816 = vmatprep.subr.bf16.mxu0 0
    %817 = vmatpush1.bf16.msra.mxu0 0
    %818 = vmatprep.subr.bf16.mxu0 0
    %819 = vmatpush1.bf16.msra.mxu0 0
    %820 = vmatprep.subr.bf16.mxu0 0
    %821 = vmatpush1.bf16.msra.mxu0 0
    %822 = vmatprep.subr.bf16.mxu0 0
    %823 = vmatpush1.bf16.msra.mxu0 0
    %824 = vmatprep.subr.bf16.mxu0 0
    %825 = vmatpush1.bf16.msra.mxu0 0
    %826 = vmatprep.subr.bf16.mxu0 0
    %827 = vmatpush1.bf16.msra.mxu0 0
    %828 = vmatprep.subr.bf16.mxu0 0
    %829 = vmatpush1.bf16.msra.mxu0 0
    %830 = vmatprep.subr.bf16.mxu0 0
    %831 = vmatpush1.bf16.msra.mxu0 0
    %832 = vmatprep.subr.bf16.mxu0 0
    %833 = vmatpush1.bf16.msra.mxu0 0
    %834 = vmatprep.mubr.bf16.mxu0 0
    %835 = vmatmul.mubr.bf16.gmra.mrb[0].mxu0 %v800
    %v836 = vpop.f32.mrb[0].mxu0
    %v837 = vadd.f32 0.0, %v836
    %v838 = vpop.f32.mrb[0].mxu0
    %v839 = vpop.f32.mrb[0].mxu0
    %v840 = vpop.f32.mrb[0].mxu0
    %841 = vdwg.mxu0
    %v842 = vadd.f32 %v790, %v837
    %v843 = vpack.c.bf16 %v766, %v766
    %845 = vrot.lane.b32.xlu0 %v843, 64
    %v846 = vpop.permute.xlu0 %845
    %v848 = vsel %vm269, %v846, 0
    %850 = vmatprep.subr.bf16.mxu0 0
    %851 = vmatpush1.bf16.msra.mxu0 %v322
    %852 = vmatprep.subr.bf16.mxu0 0
    %853 = vmatpush1.bf16.msra.mxu0 %v323
    %854 = vmatprep.subr.bf16.mxu0 0
    %855 = vmatpush1.bf16.msra.mxu0 0
    %856 = vmatprep.subr.bf16.mxu0 0
    %857 = vmatpush1.bf16.msra.mxu0 0
    %858 = vmatprep.subr.bf16.mxu0 0
    %859 = vmatpush1.bf16.msra.mxu0 0
    %860 = vmatprep.subr.bf16.mxu0 0
    %861 = vmatpush1.bf16.msra.mxu0 0
    %862 = vmatprep.subr.bf16.mxu0 0
    %863 = vmatpush1.bf16.msra.mxu0 0
    %864 = vmatprep.subr.bf16.mxu0 0
    %865 = vmatpush1.bf16.msra.mxu0 0
    %866 = vmatprep.subr.bf16.mxu0 0
    %867 = vmatpush1.bf16.msra.mxu0 0
    %868 = vmatprep.subr.bf16.mxu0 0
    %869 = vmatpush1.bf16.msra.mxu0 0
    %870 = vmatprep.subr.bf16.mxu0 0
    %871 = vmatpush1.bf16.msra.mxu0 0
    %872 = vmatprep.subr.bf16.mxu0 0
    %873 = vmatpush1.bf16.msra.mxu0 0
    %874 = vmatprep.subr.bf16.mxu0 0
    %875 = vmatpush1.bf16.msra.mxu0 0
    %876 = vmatprep.subr.bf16.mxu0 0
    %877 = vmatpush1.bf16.msra.mxu0 0
    %878 = vmatprep.subr.bf16.mxu0 0
    %879 = vmatpush1.bf16.msra.mxu0 0
    %880 = vmatprep.subr.bf16.mxu0 0
    %881 = vmatpush1.bf16.msra.mxu0 0
    %882 = vmatprep.mubr.bf16.mxu0 0
    %883 = vmatmul.mubr.bf16.gmra.mrb[0].mxu0 %v848
    %v884 = vpop.f32.mrb[0].mxu0
    %v885 = vadd.f32 0.0, %v884
    %v886 = vpop.f32.mrb[0].mxu0
    %v887 = vpop.f32.mrb[0].mxu0
    %v888 = vpop.f32.mrb[0].mxu0
    %889 = vdwg.mxu0
    %v890 = vadd.f32 %v794, %v885
    %v891 = vxor.u32 %v842, 2147483648
    %v892 = vmul.f32 %v891, 1.442695
    %v893 = vpow.pop %v892
    %v894 = vadd.f32 %v893, 1.0
    %v895 = vrcp.pop %v894
    %v896 = vmul.f32 1.0, %v895
    %v897 = vtanh.pop %v842
    %v898 = vmul.f32 %v896, %v736
    %900 = vrot.lane.b32.xlu0 %v897, 32
    %v901 = vpop.permute.xlu0 %900
    %v903 = vmul.f32 %v896, %v901
    %905 = vrot.lane.b32.xlu0 %v903, 32
    %v906 = vpop.permute.xlu0 %905
    %v908 = vadd.f32 %v898, %v906
    %v909 = vtanh.pop %v908
    %911 = vrot.lane.b32.xlu0 %v909, 32
    %v912 = vpop.permute.xlu0 %911
    %v914 = vmul.f32 %v896, %v912
    %v915 = vxor.u32 %v890, 2147483648
    %v916 = vmul.f32 %v915, 1.442695
    %v917 = vpow.pop %v916
    %v918 = vadd.f32 %v917, 1.0
    %v919 = vrcp.pop %v918
    %v920 = vmul.f32 1.0, %v919
    %v921 = vtanh.pop %v890
    %v922 = vmul.f32 %v920, %v760
    %924 = vrot.lane.b32.xlu0 %v921, 32
    %v925 = vpop.permute.xlu0 %924
    %v927 = vmul.f32 %v920, %v925
    %929 = vrot.lane.b32.xlu0 %v927, 32
    %v930 = vpop.permute.xlu0 %929
    %v932 = vadd.f32 %v922, %v930
    %v933 = vtanh.pop %v932
    %935 = vrot.lane.b32.xlu0 %v933, 32
    %v936 = vpop.permute.xlu0 %935
    %v938 = vmul.f32 %v920, %v936
    %vm939 = vcmp.gt.s32.totalorder %v246, 3
    %v940 = vsel %vm939, 1, 0
    %v941 = vcvt.s32.f32 %v940
    %vm942 = vcmp.gt.s32.totalorder %v246, 4
    %v943 = vsel %vm942, 1, 0
    %v944 = vcvt.s32.f32 %v943
    %946 = vset.pattern.permute.xlu0 0
    %947 = vperm.xlu0 %946, %v941
    %v948 = vpop.permute.xlu0 %947
    %v950 = vmul.f32 %v948, %v914
    %v951 = vadd.f32 %v779, %v950
    %953 = vset.pattern.permute.xlu0 0
    %954 = vperm.xlu0 %953, %v944
    %v955 = vpop.permute.xlu0 %954
    %v957 = vmul.f32 %v955, %v938
    %v958 = vadd.f32 %v786, %v957
    %v959 = vld [vmem:[%s793] sm:$0xff]
    %v960 = vld [vmem:[%s789 + $0x8] sm:$0xff]
    %v961 = vpack.c.bf16 %v914, %v914
    %963 = vrot.lane.b32.xlu0 %v961, 64
    %v964 = vpop.permute.xlu0 %963
    %v966 = vsel %vm269, %v964, 0
    %968 = vmatprep.subr.bf16.mxu0 0
    %969 = vmatpush1.bf16.msra.mxu0 %v265
    %970 = vmatprep.subr.bf16.mxu0 0
    %971 = vmatpush1.bf16.msra.mxu0 %v266
    %972 = vmatprep.subr.bf16.mxu0 0
    %973 = vmatpush1.bf16.msra.mxu0 0
    %974 = vmatprep.subr.bf16.mxu0 0
    %975 = vmatpush1.bf16.msra.mxu0 0
    %976 = vmatprep.subr.bf16.mxu0 0
    %977 = vmatpush1.bf16.msra.mxu0 0
    %978 = vmatprep.subr.bf16.mxu0 0
    %979 = vmatpush1.bf16.msra.mxu0 0
    %980 = vmatprep.subr.bf16.mxu0 0
    %981 = vmatpush1.bf16.msra.mxu0 0
    %982 = vmatprep.subr.bf16.mxu0 0
    %983 = vmatpush1.bf16.msra.mxu0 0
    %984 = vmatprep.subr.bf16.mxu0 0
    %985 = vmatpush1.bf16.msra.mxu0 0
    %986 = vmatprep.subr.bf16.mxu0 0
    %987 = vmatpush1.bf16.msra.mxu0 0
    %988 = vmatprep.subr.bf16.mxu0 0
    %989 = vmatpush1.bf16.msra.mxu0 0
    %990 = vmatprep.subr.bf16.mxu0 0
    %991 = vmatpush1.bf16.msra.mxu0 0
    %992 = vmatprep.subr.bf16.mxu0 0
    %993 = vmatpush1.bf16.msra.mxu0 0
    %994 = vmatprep.subr.bf16.mxu0 0
    %995 = vmatpush1.bf16.msra.mxu0 0
    %996 = vmatprep.subr.bf16.mxu0 0
    %997 = vmatpush1.bf16.msra.mxu0 0
    %998 = vmatprep.subr.bf16.mxu0 0
    %999 = vmatpush1.bf16.msra.mxu0 0
    %1000 = vmatprep.mubr.bf16.mxu0 0
    %1001 = vmatmul.mubr.bf16.gmra.mrb[0].mxu0 %v966
    %v1002 = vpop.f32.mrb[0].mxu0
    %v1003 = vadd.f32 0.0, %v1002
    %v1004 = vpop.f32.mrb[0].mxu0
    %v1005 = vpop.f32.mrb[0].mxu0
    %v1006 = vpop.f32.mrb[0].mxu0
    %1007 = vdwg.mxu0
    %v1008 = vadd.f32 %v959, %v1003
    %v1009 = vpack.c.bf16 %v938, %v938
    %1011 = vrot.lane.b32.xlu0 %v1009, 64
    %v1012 = vpop.permute.xlu0 %1011
    %v1014 = vsel %vm269, %v1012, 0
    %1016 = vmatprep.subr.bf16.mxu0 0
    %1017 = vmatpush1.bf16.msra.mxu0 %v322
    %1018 = vmatprep.subr.bf16.mxu0 0
    %1019 = vmatpush1.bf16.msra.mxu0 %v323
    %1020 = vmatprep.subr.bf16.mxu0 0
    %1021 = vmatpush1.bf16.msra.mxu0 0
    %1022 = vmatprep.subr.bf16.mxu0 0
    %1023 = vmatpush1.bf16.msra.mxu0 0
    %1024 = vmatprep.subr.bf16.mxu0 0
    %1025 = vmatpush1.bf16.msra.mxu0 0
    %1026 = vmatprep.subr.bf16.mxu0 0
    %1027 = vmatpush1.bf16.msra.mxu0 0
    %1028 = vmatprep.subr.bf16.mxu0 0
    %1029 = vmatpush1.bf16.msra.mxu0 0
    %1030 = vmatprep.subr.bf16.mxu0 0
    %1031 = vmatpush1.bf16.msra.mxu0 0
    %1032 = vmatprep.subr.bf16.mxu0 0
    %1033 = vmatpush1.bf16.msra.mxu0 0
    %1034 = vmatprep.subr.bf16.mxu0 0
    %1035 = vmatpush1.bf16.msra.mxu0 0
    %1036 = vmatprep.subr.bf16.mxu0 0
    %1037 = vmatpush1.bf16.msra.mxu0 0
    %1038 = vmatprep.subr.bf16.mxu0 0
    %1039 = vmatpush1.bf16.msra.mxu0 0
    %1040 = vmatprep.subr.bf16.mxu0 0
    %1041 = vmatpush1.bf16.msra.mxu0 0
    %1042 = vmatprep.subr.bf16.mxu0 0
    %1043 = vmatpush1.bf16.msra.mxu0 0
    %1044 = vmatprep.subr.bf16.mxu0 0
    %1045 = vmatpush1.bf16.msra.mxu0 0
    %1046 = vmatprep.subr.bf16.mxu0 0
    %1047 = vmatpush1.bf16.msra.mxu0 0
    %1048 = vmatprep.mubr.bf16.mxu0 0
    %1049 = vmatmul.mubr.bf16.gmra.mrb[0].mxu0 %v1014
    %v1050 = vpop.f32.mrb[0].mxu0
    %v1051 = vadd.f32 0.0, %v1050
    %v1052 = vpop.f32.mrb[0].mxu0
    %v1053 = vpop.f32.mrb[0].mxu0
    %v1054 = vpop.f32.mrb[0].mxu0
    %1055 = vdwg.mxu0
    %v1056 = vadd.f32 %v960, %v1051
    %v1057 = vxor.u32 %v1008, 2147483648
    %v1058 = vmul.f32 %v1057, 1.442695
    %v1059 = vpow.pop %v1058
    %v1060 = vadd.f32 %v1059, 1.0
    %v1061 = vrcp.pop %v1060
    %v1062 = vmul.f32 1.0, %v1061
    %v1063 = vtanh.pop %v1008
    %v1064 = vmul.f32 %v1062, %v908
    %1066 = vrot.lane.b32.xlu0 %v1063, 32
    %v1067 = vpop.permute.xlu0 %1066
    %v1069 = vmul.f32 %v1062, %v1067
    %1071 = vrot.lane.b32.xlu0 %v1069, 32
    %v1072 = vpop.permute.xlu0 %1071
    %v1074 = vadd.f32 %v1064, %v1072
    %v1075 = vtanh.pop %v1074
    %1077 = vrot.lane.b32.xlu0 %v1075, 32
    %v1078 = vpop.permute.xlu0 %1077
    %v1080 = vmul.f32 %v1062, %v1078
    %v1081 = vxor.u32 %v1056, 2147483648
    %v1082 = vmul.f32 %v1081, 1.442695
    %v1083 = vpow.pop %v1082
    %v1084 = vadd.f32 %v1083, 1.0
    %v1085 = vrcp.pop %v1084
    %v1086 = vmul.f32 1.0, %v1085
    %v1087 = vtanh.pop %v1056
    %v1088 = vmul.f32 %v1086, %v932
    %1090 = vrot.lane.b32.xlu0 %v1087, 32
    %v1091 = vpop.permute.xlu0 %1090
    %v1093 = vmul.f32 %v1086, %v1091
    %1095 = vrot.lane.b32.xlu0 %v1093, 32
    %v1096 = vpop.permute.xlu0 %1095
    %v1098 = vadd.f32 %v1088, %v1096
    %v1099 = vtanh.pop %v1098
    %1101 = vrot.lane.b32.xlu0 %v1099, 32
    %v1102 = vpop.permute.xlu0 %1101
    %v1104 = vmul.f32 %v1086, %v1102
    %v1105 = vmul.f32 %v955, %v1080
    %v1106 = vadd.f32 %v951, %v1105
    %v1107 = vmul.f32 %v948, %v1104
    %v1108 = vadd.f32 %v958, %v1107
    %v1109 = vld [vmem:[%s621] sm:$0xff]
    %v1110 = vld [vmem:[%s617 + $0x8] sm:$0xff]
    %v1111 = vpack.c.bf16 %v1080, %v1080
    %1113 = vrot.lane.b32.xlu0 %v1111, 64
    %v1114 = vpop.permute.xlu0 %1113
    %v1116 = vsel %vm269, %v1114, 0
    %1118 = vmatprep.subr.bf16.mxu0 0
    %1119 = vmatpush1.bf16.msra.mxu0 %v265
    %1120 = vmatprep.subr.bf16.mxu0 0
    %1121 = vmatpush1.bf16.msra.mxu0 %v266
    %1122 = vmatprep.subr.bf16.mxu0 0
    %1123 = vmatpush1.bf16.msra.mxu0 0
    %1124 = vmatprep.subr.bf16.mxu0 0
    %1125 = vmatpush1.bf16.msra.mxu0 0
    %1126 = vmatprep.subr.bf16.mxu0 0
    %1127 = vmatpush1.bf16.msra.mxu0 0
    %1128 = vmatprep.subr.bf16.mxu0 0
    %1129 = vmatpush1.bf16.msra.mxu0 0
    %1130 = vmatprep.subr.bf16.mxu0 0
    %1131 = vmatpush1.bf16.msra.mxu0 0
    %1132 = vmatprep.subr.bf16.mxu0 0
    %1133 = vmatpush1.bf16.msra.mxu0 0
    %1134 = vmatprep.subr.bf16.mxu0 0
    %1135 = vmatpush1.bf16.msra.mxu0 0
    %1136 = vmatprep.subr.bf16.mxu0 0
    %1137 = vmatpush1.bf16.msra.mxu0 0
    %1138 = vmatprep.subr.bf16.mxu0 0
    %1139 = vmatpush1.bf16.msra.mxu0 0
    %1140 = vmatprep.subr.bf16.mxu0 0
    %1141 = vmatpush1.bf16.msra.mxu0 0
    %1142 = vmatprep.subr.bf16.mxu0 0
    %1143 = vmatpush1.bf16.msra.mxu0 0
    %1144 = vmatprep.subr.bf16.mxu0 0
    %1145 = vmatpush1.bf16.msra.mxu0 0
    %1146 = vmatprep.subr.bf16.mxu0 0
    %1147 = vmatpush1.bf16.msra.mxu0 0
    %1148 = vmatprep.subr.bf16.mxu0 0
    %1149 = vmatpush1.bf16.msra.mxu0 0
    %1150 = vmatprep.mubr.bf16.mxu0 0
    %1151 = vmatmul.mubr.bf16.gmra.mrb[0].mxu0 %v1116
    %v1152 = vpop.f32.mrb[0].mxu0
    %v1153 = vadd.f32 0.0, %v1152
    %v1154 = vpop.f32.mrb[0].mxu0
    %v1155 = vpop.f32.mrb[0].mxu0
    %v1156 = vpop.f32.mrb[0].mxu0
    %1157 = vdwg.mxu0
    %v1158 = vadd.f32 %v1109, %v1153
    %v1159 = vpack.c.bf16 %v1104, %v1104
    %1161 = vrot.lane.b32.xlu0 %v1159, 64
    %v1162 = vpop.permute.xlu0 %1161
    %v1164 = vsel %vm269, %v1162, 0
    %1166 = vmatprep.subr.bf16.mxu0 0
    %1167 = vmatpush1.bf16.msra.mxu0 %v322
    %1168 = vmatprep.subr.bf16.mxu0 0
    %1169 = vmatpush1.bf16.msra.mxu0 %v323
    %1170 = vmatprep.subr.bf16.mxu0 0
    %1171 = vmatpush1.bf16.msra.mxu0 0
    %1172 = vmatprep.subr.bf16.mxu0 0
    %1173 = vmatpush1.bf16.msra.mxu0 0
    %1174 = vmatprep.subr.bf16.mxu0 0
    %1175 = vmatpush1.bf16.msra.mxu0 0
    %1176 = vmatprep.subr.bf16.mxu0 0
    %1177 = vmatpush1.bf16.msra.mxu0 0
    %1178 = vmatprep.subr.bf16.mxu0 0
    %1179 = vmatpush1.bf16.msra.mxu0 0
    %1180 = vmatprep.subr.bf16.mxu0 0
    %1181 = vmatpush1.bf16.msra.mxu0 0
    %1182 = vmatprep.subr.bf16.mxu0 0
    %1183 = vmatpush1.bf16.msra.mxu0 0
    %1184 = vmatprep.subr.bf16.mxu0 0
    %1185 = vmatpush1.bf16.msra.mxu0 0
    %1186 = vmatprep.subr.bf16.mxu0 0
    %1187 = vmatpush1.bf16.msra.mxu0 0
    %1188 = vmatprep.subr.bf16.mxu0 0
    %1189 = vmatpush1.bf16.msra.mxu0 0
    %1190 = vmatprep.subr.bf16.mxu0 0
    %1191 = vmatpush1.bf16.msra.mxu0 0
    %1192 = vmatprep.subr.bf16.mxu0 0
    %1193 = vmatpush1.bf16.msra.mxu0 0
    %1194 = vmatprep.subr.bf16.mxu0 0
    %1195 = vmatpush1.bf16.msra.mxu0 0
    %1196 = vmatprep.subr.bf16.mxu0 0
    %1197 = vmatpush1.bf16.msra.mxu0 0
    %1198 = vmatprep.mubr.bf16.mxu0 0
    %1199 = vmatmul.mubr.bf16.gmra.mrb[0].mxu0 %v1164
    %v1200 = vpop.f32.mrb[0].mxu0
    %v1201 = vadd.f32 0.0, %v1200
    %v1202 = vpop.f32.mrb[0].mxu0
    %v1203 = vpop.f32.mrb[0].mxu0
    %v1204 = vpop.f32.mrb[0].mxu0
    %1205 = vdwg.mxu0
    %v1206 = vadd.f32 %v1110, %v1201
    %v1207 = vxor.u32 %v1158, 2147483648
    %v1208 = vmul.f32 %v1207, 1.442695
    %v1209 = vpow.pop %v1208
    %v1210 = vadd.f32 %v1209, 1.0
    %v1211 = vrcp.pop %v1210
    %v1212 = vmul.f32 1.0, %v1211
    %v1213 = vtanh.pop %v1158
    %v1214 = vmul.f32 %v1212, %v1074
    %1216 = vrot.lane.b32.xlu0 %v1213, 32
    %v1217 = vpop.permute.xlu0 %1216
    %v1219 = vmul.f32 %v1212, %v1217
    %1221 = vrot.lane.b32.xlu0 %v1219, 32
    %v1222 = vpop.permute.xlu0 %1221
    %v1224 = vadd.f32 %v1214, %v1222
    %v1225 = vtanh.pop %v1224
    %1227 = vrot.lane.b32.xlu0 %v1225, 32
    %v1228 = vpop.permute.xlu0 %1227
    %v1230 = vmul.f32 %v1212, %v1228
    %v1231 = vxor.u32 %v1206, 2147483648
    %v1232 = vmul.f32 %v1231, 1.442695
    %v1233 = vpow.pop %v1232
    %v1234 = vadd.f32 %v1233, 1.0
    %v1235 = vrcp.pop %v1234
    %v1236 = vmul.f32 1.0, %v1235
    %v1237 = vtanh.pop %v1206
    %v1238 = vmul.f32 %v1236, %v1098
    %1240 = vrot.lane.b32.xlu0 %v1237, 32
    %v1241 = vpop.permute.xlu0 %1240
    %v1243 = vmul.f32 %v1236, %v1241
    %1245 = vrot.lane.b32.xlu0 %v1243, 32
    %v1246 = vpop.permute.xlu0 %1245
    %v1248 = vadd.f32 %v1238, %v1246
    %v1249 = vtanh.pop %v1248
    %1251 = vrot.lane.b32.xlu0 %v1249, 32
    %v1252 = vpop.permute.xlu0 %1251
    %v1254 = vmul.f32 %v1236, %v1252
    %v1255 = vmul.f32 %v783, %v1230
    %v1256 = vadd.f32 %v1106, %v1255
    %v1257 = vmul.f32 %v776, %v1254
    %v1258 = vadd.f32 %v1108, %v1257
    %v1259 = vld [vmem:[%s449] sm:$0xff]
    %v1260 = vld [vmem:[%s445 + $0x8] sm:$0xff]
    %v1261 = vpack.c.bf16 %v1230, %v1230
    %1263 = vrot.lane.b32.xlu0 %v1261, 64
    %v1264 = vpop.permute.xlu0 %1263
    %v1266 = vsel %vm269, %v1264, 0
    %1268 = vmatprep.subr.bf16.mxu0 0
    %1269 = vmatpush1.bf16.msra.mxu0 %v265
    %1270 = vmatprep.subr.bf16.mxu0 0
    %1271 = vmatpush1.bf16.msra.mxu0 %v266
    %1272 = vmatprep.subr.bf16.mxu0 0
    %1273 = vmatpush1.bf16.msra.mxu0 0
    %1274 = vmatprep.subr.bf16.mxu0 0
    %1275 = vmatpush1.bf16.msra.mxu0 0
    %1276 = vmatprep.subr.bf16.mxu0 0
    %1277 = vmatpush1.bf16.msra.mxu0 0
    %1278 = vmatprep.subr.bf16.mxu0 0
    %1279 = vmatpush1.bf16.msra.mxu0 0
    %1280 = vmatprep.subr.bf16.mxu0 0
    %1281 = vmatpush1.bf16.msra.mxu0 0
    %1282 = vmatprep.subr.bf16.mxu0 0
    %1283 = vmatpush1.bf16.msra.mxu0 0
    %1284 = vmatprep.subr.bf16.mxu0 0
    %1285 = vmatpush1.bf16.msra.mxu0 0
    %1286 = vmatprep.subr.bf16.mxu0 0
    %1287 = vmatpush1.bf16.msra.mxu0 0
    %1288 = vmatprep.subr.bf16.mxu0 0
    %1289 = vmatpush1.bf16.msra.mxu0 0
    %1290 = vmatprep.subr.bf16.mxu0 0
    %1291 = vmatpush1.bf16.msra.mxu0 0
    %1292 = vmatprep.subr.bf16.mxu0 0
    %1293 = vmatpush1.bf16.msra.mxu0 0
    %1294 = vmatprep.subr.bf16.mxu0 0
    %1295 = vmatpush1.bf16.msra.mxu0 0
    %1296 = vmatprep.subr.bf16.mxu0 0
    %1297 = vmatpush1.bf16.msra.mxu0 0
    %1298 = vmatprep.subr.bf16.mxu0 0
    %1299 = vmatpush1.bf16.msra.mxu0 0
    %1300 = vmatprep.mubr.bf16.mxu0 0
    %1301 = vmatmul.mubr.bf16.gmra.mrb[0].mxu0 %v1266
    %v1302 = vpop.f32.mrb[0].mxu0
    %v1303 = vadd.f32 0.0, %v1302
    %v1304 = vpop.f32.mrb[0].mxu0
    %v1305 = vpop.f32.mrb[0].mxu0
    %v1306 = vpop.f32.mrb[0].mxu0
    %1307 = vdwg.mxu0
    %v1308 = vadd.f32 %v1259, %v1303
    %v1309 = vpack.c.bf16 %v1254, %v1254
    %1311 = vrot.lane.b32.xlu0 %v1309, 64
    %v1312 = vpop.permute.xlu0 %1311
    %v1314 = vsel %vm269, %v1312, 0
    %1316 = vmatprep.subr.bf16.mxu0 0
    %1317 = vmatpush1.bf16.msra.mxu0 %v322
    %1318 = vmatprep.subr.bf16.mxu0 0
    %1319 = vmatpush1.bf16.msra.mxu0 %v323
    %1320 = vmatprep.subr.bf16.mxu0 0
    %1321 = vmatpush1.bf16.msra.mxu0 0
    %1322 = vmatprep.subr.bf16.mxu0 0
    %1323 = vmatpush1.bf16.msra.mxu0 0
    %1324 = vmatprep.subr.bf16.mxu0 0
    %1325 = vmatpush1.bf16.msra.mxu0 0
    %1326 = vmatprep.subr.bf16.mxu0 0
    %1327 = vmatpush1.bf16.msra.mxu0 0
    %1328 = vmatprep.subr.bf16.mxu0 0
    %1329 = vmatpush1.bf16.msra.mxu0 0
    %1330 = vmatprep.subr.bf16.mxu0 0
    %1331 = vmatpush1.bf16.msra.mxu0 0
    %1332 = vmatprep.subr.bf16.mxu0 0
    %1333 = vmatpush1.bf16.msra.mxu0 0
    %1334 = vmatprep.subr.bf16.mxu0 0
    %1335 = vmatpush1.bf16.msra.mxu0 0
    %1336 = vmatprep.subr.bf16.mxu0 0
    %1337 = vmatpush1.bf16.msra.mxu0 0
    %1338 = vmatprep.subr.bf16.mxu0 0
    %1339 = vmatpush1.bf16.msra.mxu0 0
    %1340 = vmatprep.subr.bf16.mxu0 0
    %1341 = vmatpush1.bf16.msra.mxu0 0
    %1342 = vmatprep.subr.bf16.mxu0 0
    %1343 = vmatpush1.bf16.msra.mxu0 0
    %1344 = vmatprep.subr.bf16.mxu0 0
    %1345 = vmatpush1.bf16.msra.mxu0 0
    %1346 = vmatprep.subr.bf16.mxu0 0
    %1347 = vmatpush1.bf16.msra.mxu0 0
    %1348 = vmatprep.mubr.bf16.mxu0 0
    %1349 = vmatmul.mubr.bf16.gmra.mrb[0].mxu0 %v1314
    %v1350 = vpop.f32.mrb[0].mxu0
    %v1351 = vadd.f32 0.0, %v1350
    %v1352 = vpop.f32.mrb[0].mxu0
    %v1353 = vpop.f32.mrb[0].mxu0
    %v1354 = vpop.f32.mrb[0].mxu0
    %1355 = vdwg.mxu0
    %v1356 = vadd.f32 %v1260, %v1351
    %v1357 = vxor.u32 %v1308, 2147483648
    %v1358 = vmul.f32 %v1357, 1.442695
    %v1359 = vpow.pop %v1358
    %v1360 = vadd.f32 %v1359, 1.0
    %v1361 = vrcp.pop %v1360
    %v1362 = vmul.f32 1.0, %v1361
    %v1363 = vtanh.pop %v1308
    %v1364 = vmul.f32 %v1362, %v1224
    %1366 = vrot.lane.b32.xlu0 %v1363, 32
    %v1367 = vpop.permute.xlu0 %1366
    %v1369 = vmul.f32 %v1362, %v1367
    %1371 = vrot.lane.b32.xlu0 %v1369, 32
    %v1372 = vpop.permute.xlu0 %1371
    %v1374 = vadd.f32 %v1364, %v1372
    %v1375 = vtanh.pop %v1374
    %1377 = vrot.lane.b32.xlu0 %v1375, 32
    %v1378 = vpop.permute.xlu0 %1377
    %v1380 = vmul.f32 %v1362, %v1378
    %v1381 = vxor.u32 %v1356, 2147483648
    %v1382 = vmul.f32 %v1381, 1.442695
    %v1383 = vpow.pop %v1382
    %v1384 = vadd.f32 %v1383, 1.0
    %v1385 = vrcp.pop %v1384
    %v1386 = vmul.f32 1.0, %v1385
    %v1387 = vtanh.pop %v1356
    %v1388 = vmul.f32 %v1386, %v1248
    %1390 = vrot.lane.b32.xlu0 %v1387, 32
    %v1391 = vpop.permute.xlu0 %1390
    %v1393 = vmul.f32 %v1386, %v1391
    %1395 = vrot.lane.b32.xlu0 %v1393, 32
    %v1396 = vpop.permute.xlu0 %1395
    %v1398 = vadd.f32 %v1388, %v1396
    %v1399 = vtanh.pop %v1398
    %1401 = vrot.lane.b32.xlu0 %v1399, 32
    %v1402 = vpop.permute.xlu0 %1401
    %v1404 = vmul.f32 %v1386, %v1402
    %v1405 = vmul.f32 %v611, %v1380
    %v1406 = vadd.f32 %v1256, %v1405
    %v1407 = vmul.f32 %v604, %v1404
    %v1408 = vadd.f32 %v1258, %v1407
    %v1409 = vld [vmem:[%s255] sm:$0xff]
    %v1410 = vld [vmem:[%s251 + $0x8] sm:$0xff]
    %v1411 = vpack.c.bf16 %v1380, %v1380
    %1413 = vrot.lane.b32.xlu0 %v1411, 64
    %v1414 = vpop.permute.xlu0 %1413
    %v1416 = vsel %vm269, %v1414, 0
    %1418 = vmatprep.subr.bf16.mxu0 0
    %1419 = vmatpush1.bf16.msra.mxu0 %v265
    %1420 = vmatprep.subr.bf16.mxu0 0
    %1421 = vmatpush1.bf16.msra.mxu0 %v266
    %1422 = vmatprep.subr.bf16.mxu0 0
    %1423 = vmatpush1.bf16.msra.mxu0 0
    %1424 = vmatprep.subr.bf16.mxu0 0
    %1425 = vmatpush1.bf16.msra.mxu0 0
    %1426 = vmatprep.subr.bf16.mxu0 0
    %1427 = vmatpush1.bf16.msra.mxu0 0
    %1428 = vmatprep.subr.bf16.mxu0 0
    %1429 = vmatpush1.bf16.msra.mxu0 0
    %1430 = vmatprep.subr.bf16.mxu0 0
    %1431 = vmatpush1.bf16.msra.mxu0 0
    %1432 = vmatprep.subr.bf16.mxu0 0
    %1433 = vmatpush1.bf16.msra.mxu0 0
    %1434 = vmatprep.subr.bf16.mxu0 0
    %1435 = vmatpush1.bf16.msra.mxu0 0
    %1436 = vmatprep.subr.bf16.mxu0 0
    %1437 = vmatpush1.bf16.msra.mxu0 0
    %1438 = vmatprep.subr.bf16.mxu0 0
    %1439 = vmatpush1.bf16.msra.mxu0 0
    %1440 = vmatprep.subr.bf16.mxu0 0
    %1441 = vmatpush1.bf16.msra.mxu0 0
    %1442 = vmatprep.subr.bf16.mxu0 0
    %1443 = vmatpush1.bf16.msra.mxu0 0
    %1444 = vmatprep.subr.bf16.mxu0 0
    %1445 = vmatpush1.bf16.msra.mxu0 0
    %1446 = vmatprep.subr.bf16.mxu0 0
    %1447 = vmatpush1.bf16.msra.mxu0 0
    %1448 = vmatprep.subr.bf16.mxu0 0
    %1449 = vmatpush1.bf16.msra.mxu0 0
    %1450 = vmatprep.mubr.bf16.mxu0 0
    %1451 = vmatmul.mubr.bf16.gmra.mrb[0].mxu0 %v1416
    %v1452 = vpop.f32.mrb[0].mxu0
    %v1453 = vadd.f32 0.0, %v1452
    %v1454 = vpop.f32.mrb[0].mxu0
    %v1455 = vpop.f32.mrb[0].mxu0
    %v1456 = vpop.f32.mrb[0].mxu0
    %1457 = vdwg.mxu0
    %v1458 = vadd.f32 %v1409, %v1453
    %v1459 = vpack.c.bf16 %v1404, %v1404
    %1461 = vrot.lane.b32.xlu0 %v1459, 64
    %v1462 = vpop.permute.xlu0 %1461
    %v1464 = vsel %vm269, %v1462, 0
    %1466 = vmatprep.subr.bf16.mxu0 0
    %1467 = vmatpush1.bf16.msra.mxu0 %v322
    %1468 = vmatprep.subr.bf16.mxu0 0
    %1469 = vmatpush1.bf16.msra.mxu0 %v323
    %1470 = vmatprep.subr.bf16.mxu0 0
    %1471 = vmatpush1.bf16.msra.mxu0 0
    %1472 = vmatprep.subr.bf16.mxu0 0
    %1473 = vmatpush1.bf16.msra.mxu0 0
    %1474 = vmatprep.subr.bf16.mxu0 0
    %1475 = vmatpush1.bf16.msra.mxu0 0
    %1476 = vmatprep.subr.bf16.mxu0 0
    %1477 = vmatpush1.bf16.msra.mxu0 0
    %1478 = vmatprep.subr.bf16.mxu0 0
    %1479 = vmatpush1.bf16.msra.mxu0 0
    %1480 = vmatprep.subr.bf16.mxu0 0
    %1481 = vmatpush1.bf16.msra.mxu0 0
    %1482 = vmatprep.subr.bf16.mxu0 0
    %1483 = vmatpush1.bf16.msra.mxu0 0
    %1484 = vmatprep.subr.bf16.mxu0 0
    %1485 = vmatpush1.bf16.msra.mxu0 0
    %1486 = vmatprep.subr.bf16.mxu0 0
    %1487 = vmatpush1.bf16.msra.mxu0 0
    %1488 = vmatprep.subr.bf16.mxu0 0
    %1489 = vmatpush1.bf16.msra.mxu0 0
    %1490 = vmatprep.subr.bf16.mxu0 0
    %1491 = vmatpush1.bf16.msra.mxu0 0
    %1492 = vmatprep.subr.bf16.mxu0 0
    %1493 = vmatpush1.bf16.msra.mxu0 0
    %1494 = vmatprep.subr.bf16.mxu0 0
    %1495 = vmatpush1.bf16.msra.mxu0 0
    %1496 = vmatprep.subr.bf16.mxu0 0
    %1497 = vmatpush1.bf16.msra.mxu0 0
    %1498 = vmatprep.mubr.bf16.mxu0 0
    %1499 = vmatmul.mubr.bf16.gmra.mrb[0].mxu0 %v1464
    %v1500 = vpop.f32.mrb[0].mxu0
    %v1501 = vadd.f32 0.0, %v1500
    %v1502 = vpop.f32.mrb[0].mxu0
    %v1503 = vpop.f32.mrb[0].mxu0
    %v1504 = vpop.f32.mrb[0].mxu0
    %1505 = vdwg.mxu0
    %v1506 = vadd.f32 %v1410, %v1501
    %v1507 = vxor.u32 %v1458, 2147483648
    %v1508 = vmul.f32 %v1507, 1.442695
    %v1509 = vpow.pop %v1508
    %v1510 = vadd.f32 %v1509, 1.0
    %v1511 = vrcp.pop %v1510
    %v1512 = vmul.f32 1.0, %v1511
    %v1513 = vtanh.pop %v1458
    %v1514 = vmul.f32 %v1512, %v1374
    %1516 = vrot.lane.b32.xlu0 %v1513, 32
    %v1517 = vpop.permute.xlu0 %1516
    %v1519 = vmul.f32 %v1512, %v1517
    %1521 = vrot.lane.b32.xlu0 %v1519, 32
    %v1522 = vpop.permute.xlu0 %1521
    %v1524 = vadd.f32 %v1514, %v1522
    %v1525 = vtanh.pop %v1524
    %1527 = vrot.lane.b32.xlu0 %v1525, 32
    %v1528 = vpop.permute.xlu0 %1527
    %v1530 = vmul.f32 %v1512, %v1528
    %v1531 = vxor.u32 %v1506, 2147483648
    %v1532 = vmul.f32 %v1531, 1.442695
    %v1533 = vpow.pop %v1532
    %v1534 = vadd.f32 %v1533, 1.0
    %v1535 = vrcp.pop %v1534
    %v1536 = vmul.f32 1.0, %v1535
    %v1537 = vtanh.pop %v1506
    %v1538 = vmul.f32 %v1536, %v1398
    %1540 = vrot.lane.b32.xlu0 %v1537, 32
    %v1541 = vpop.permute.xlu0 %1540
    %v1543 = vmul.f32 %v1536, %v1541
    %1545 = vrot.lane.b32.xlu0 %v1543, 32
    %v1546 = vpop.permute.xlu0 %1545
    %v1548 = vadd.f32 %v1538, %v1546
    %v1549 = vtanh.pop %v1548
    %1551 = vrot.lane.b32.xlu0 %v1549, 32
    %v1552 = vpop.permute.xlu0 %1551
    %v1554 = vmul.f32 %v1536, %v1552
    %v1555 = vmul.f32 %v439, %v1530
    %v1556 = vadd.f32 %v1406, %v1555
    %v1557 = vmul.f32 %v432, %v1554
    %v1558 = vadd.f32 %v1408, %v1557
    %vm1559 = vcmp.gt.s32.totalorder %v246, 1
    %v1560 = vsel %vm1559, %v246, 1
    %v1561 = vcvt.s32.f32 %v1560
    %v1562 = vrcp.pop %v1561
    %1564 = vset.pattern.permute.xlu0 0
    %1565 = vperm.xlu0 %1564, %v1562
    %v1566 = vpop.permute.xlu0 %1565
    %v1568 = vmul.f32 %v1556, %v1566
    %1570 = vrot.lane.b32.xlu0 %v1568, 64
    %v1571 = vpop.permute.xlu0 %1570
    %1573 = vst.msk [vmem:[#allocation11] sm:$0xff] %vm269, %v1571
    %v1574 = vmul.f32 %v1558, %v1566
    %1576 = vrot.lane.b32.xlu0 %v1574, 96
    %v1577 = vpop.permute.xlu0 %1576
    %vm1579 = vcmask 523520
    %1580 = vst.msk [vmem:[#allocation11] sm:$0xff] %vm1579, %v1577
    // Predicated region
    $region50: #{tpu_custom_call.1} parent=1 // pred_check
      _
    $region51: #{tpu_custom_call.1} parent=1 // pred_check_branch
      %1582 = sbr.rel (0) target = $region53
    $region52: #{tpu_custom_call.1} parent=1 // pred_region
      %s1584 = ssub.s32 128, 128
      %1585 = vsyncadd [#allocation5], %s1584
      %s1587 = sshll.u32 [#allocation11], 4
      %s1588 = int_to_ptr.vmem [resolvable:$true] %s1587
      %1590 = dma.vmem_to_hbm [thread:$0]  %s1588, 128, %s8, [#allocation5]
    $region53: #{tpu_custom_call.1} parent=1 // pred_fallthru
      _
    // Predicated region
    $region54: #{tpu_custom_call.1} parent=1 // pred_check
      _
    $region55: #{tpu_custom_call.1} parent=1 // pred_check_branch
      %1592 = sbr.rel (0) target = $region57
    $region56: #{tpu_custom_call.1} parent=1 // pred_region
      %1593 = dma.done [#allocation5], 128
    $region57: #{tpu_custom_call.1} parent=1 // pred_fallthru
      _
    %1594 = vsyncpa [#allocation4], 1
    %1595 = vsyncpa [#allocation7], 1
    %1596 = vsyncpa [#allocation10], 1
    %1597 = vsyncpa [#allocation5], 1

</llo_original>
